<compile_context>
chip_gen: v7x
topology: tpu7x:2x2x1
jax: 0.10.0
libtpu: 0.0.40
codegen_flags: <defaults>
</compile_context>

<pallas_src>
import functools

import numpy as np
import jax
import jax.numpy as jnp
from jax.experimental import pallas as pl
from jax.experimental.pallas import tpu as pltpu

_LRELU_SLOPE = 0.2
_LRELU_GAIN = float(np.sqrt(2.0))   # bias_act def_gain for 'lrelu'


def _lrelu(v):
    return jnp.where(v >= 0, v, _LRELU_SLOPE * v)


def _round_up(x, m):
    return ((x + m - 1) // m) * m


def _cdiv(a, b):
    return -(-a // b)


# --------------------------------------------------------------------------
# Generation-aware VMEM budgeting (v5e/v6e: 128 MiB, v7x: 64 MiB per core).
# --------------------------------------------------------------------------
def _vmem_capacity_bytes():
    try:
        info = pltpu.get_tpu_info()
        for attr in ("vmem_capacity_bytes", "vmem_bytes", "vmem_size_bytes"):
            v = getattr(info, attr, None)
            if v:
                return int(v)
    except Exception:
        pass
    return 64 << 20                      # conservative default (v7x per-core VMEM)


def _vmem_limit(need_bytes, cap):
    # Explicit scoped-VMEM limit: generous margin, never above ~90% of physical VMEM.
    return int(min(int(cap * 0.9), max(32 << 20, int(need_bytes * 2))))


# --------------------------------------------------------------------------
# Kernel A: im2col conv (3x3, pad=1) as one M-tiled matmul + bias + lrelu (+ clamp)
#   x_col : [N*H*W, K9p]   bf16 (channels-last im2col, lane-padded K)
#   w_col : [K9p, Cout]    bf16 (resident)
#   bias  : [1, Cout]      f32
#   out   : [N*H*W, Cout]  bf16
# --------------------------------------------------------------------------
def _conv_lrelu_kernel(x_ref, w_ref, b_ref, o_ref, *, act_gain, act_clamp):
    h = jnp.dot(x_ref[...], w_ref[...], preferred_element_type=jnp.float32)
    h = h + b_ref[...]
    h = _lrelu(h) * act_gain
    if act_clamp is not None:            # static (conv_clamp config)
        h = jnp.clip(h, -act_clamp, act_clamp)
    o_ref[...] = h.astype(o_ref.dtype)


def _choose_conv_rows(M, HW, Kp, C, budget):
    """Rows per grid step for kernel A: whole samples, >=256 MXU rows, grown to fill the
    VMEM budget (fewer ~0.35us grid steps), shrunk if it does not fit."""
    def need(bm):    # bf16, double-buffered x/out streams + resident weight
        return 2 * 2 * bm * Kp + 2 * 2 * Kp * C + 2 * 2 * bm * C
    bm = min(M, HW * max(1, _cdiv(256, HW)))
    while bm > HW and need(bm) > budget:
        bm = max(HW, bm // 2)
    while bm * 2 <= M and bm * 2 <= 4096 and need(bm * 2) <= budget:
        bm *= 2
    if bm % 8 != 0 and bm != M:
        bm = M                           # (8,128) rule: block dim 8-aligned or full extent
    return bm


def _conv_lrelu_pallas(x_col, w_col, b_conv, *, act_gain, act_clamp, block_m, vmem_cap):
    M, Kp = x_col.shape
    Cout = w_col.shape[1]
    need = 2 * 2 * block_m * Kp + 2 * 2 * Kp * Cout + 2 * 2 * block_m * Cout + 4 * Cout
    kern = functools.partial(_conv_lrelu_kernel, act_gain=act_gain, act_clamp=act_clamp)
    return pl.pallas_call(
        kern,
        out_shape=jax.ShapeDtypeStruct((M, Cout), jnp.bfloat16),
        grid_spec=pltpu.PrefetchScalarGridSpec(
            num_scalar_prefetch=0,
            grid=(_cdiv(M, block_m),),
            in_specs=[
                pl.BlockSpec((block_m, Kp), lambda i: (i, 0)),    # im2col rows (M-tiled)
                pl.BlockSpec((Kp, Cout), lambda i: (0, 0)),       # conv weight (resident)
                pl.BlockSpec((1, Cout), lambda i: (0, 0)),        # bias (resident)
            ],
            out_specs=pl.BlockSpec((block_m, Cout), lambda i: (i, 0)),
        ),
        compiler_params=pltpu.CompilerParams(
            dimension_semantics=("parallel",),
            vmem_limit_bytes=_vmem_limit(need, vmem_cap)),
    )(x_col, w_col, b_conv)


# --------------------------------------------------------------------------
# Kernel B: fc (+lrelu) + `out` FC + cmap projection, K-tiled reduction.
#   feat  : [N, K_pad] bf16 ((h,w,c)-ordered flatten, K-tiled)
#   wfc   : [K_pad, C] bf16 (K-tiled)    bfc : [1, C] f32
#   wout  : [C, O]     bf16              bout: [1, O] f32
#   cmap  : [N, O] f32 (dummy [N,1] when cmap_dim == 0)
#   out   : [N, 1] if cmap_dim > 0 else [N, O]   (f32)
# --------------------------------------------------------------------------
def _fc_head_kernel(feat_ref, wfc_ref, bfc_ref, wout_ref, bout_ref, cmap_ref,
                    o_ref, acc_ref, *, cmap_dim):
    k = pl.program_id(0)

    @pl.when(k == 0)
    def _init():
        acc_ref[...] = jnp.zeros_like(acc_ref)

    acc_ref[...] += jnp.dot(feat_ref[...], wfc_ref[...],
                            preferred_element_type=jnp.float32)

    @pl.when(k == pl.num_programs(0) - 1)
    def _finalize():
        h = acc_ref[...] + bfc_ref[...]
        h = _lrelu(h) * _LRELU_GAIN
        z = jnp.dot(h.astype(wout_ref.dtype), wout_ref[...],
                    preferred_element_type=jnp.float32) + bout_ref[...]
        if cmap_dim > 0:                 # static
            z = jnp.sum(z * cmap_ref[...], axis=1, keepdims=True) * (1.0 / np.sqrt(cmap_dim))
        o_ref[...] = z


def _choose_fc_ktiling(K, N, C, budget):
    """(block_k, n_k): block_k multiple of 128, block_k*n_k >= K (caller zero-pads),
    double-buffered bf16 feat/wfc streams fit the budget. No full-K fallback."""
    K128 = _round_up(K, 128)
    per_k = 2 * 2 * (N + C)              # bf16, double-buffered, bytes per unit of K
    resident = 4 * N * C + 4 * 4 * C     # f32 accumulator + small resident operands
    avail = max(budget - resident, 1 << 20)
    bk_cap = max(128, (avail // per_k) // 128 * 128)
    if bk_cap >= K128:
        return K128, 1
    for bk in range(bk_cap, 127, -128):  # prefer an exact divisor (no K padding needed)
        if K128 % bk == 0:
            return bk, K128 // bk
    n_k = _cdiv(K128, bk_cap)
    return _round_up(_cdiv(K128, n_k), 128), n_k


def _fc_head_pallas(feat, wfc, bfc, wout, bout, cmap_in, *, cmap_dim, block_k, vmem_cap):
    N, K_pad = feat.shape
    C = wfc.shape[1]
    O = wout.shape[1]
    out_dim = 1 if cmap_dim > 0 else O
    n_k = K_pad // block_k
    need = (2 * 2 * (N * block_k + block_k * C) + 4 * N * C + 2 * 2 * C * O
            + 4 * (C + O + N * cmap_in.shape[1] + N * out_dim))
    kern = functools.partial(_fc_head_kernel, cmap_dim=cmap_dim)
    return pl.pallas_call(
        kern,
        out_shape=jax.ShapeDtypeStruct((N, out_dim), jnp.float32),
        grid_spec=pltpu.PrefetchScalarGridSpec(
            num_scalar_prefetch=0,
            grid=(n_k,),
            in_specs=[
                pl.BlockSpec((N, block_k), lambda k: (0, k)),          # features (K-tiled)
                pl.BlockSpec((block_k, C), lambda k: (k, 0)),          # fc weight (K-tiled)
                pl.BlockSpec((1, C), lambda k: (0, 0)),                # fc bias (resident)
                pl.BlockSpec((C, O), lambda k: (0, 0)),                # out weight (resident)
                pl.BlockSpec((1, O), lambda k: (0, 0)),                # out bias (resident)
                pl.BlockSpec((N, cmap_in.shape[1]), lambda k: (0, 0)), # cmap (resident)
            ],
            out_specs=pl.BlockSpec((N, out_dim), lambda k: (0, 0)),
            scratch_shapes=[pltpu.VMEM((N, C), jnp.float32)],          # f32 fc accumulator
        ),
        compiler_params=pltpu.CompilerParams(
            dimension_semantics=("arbitrary",),
            vmem_limit_bytes=_vmem_limit(need, vmem_cap)),
    )(feat, wfc, bfc, wout, bout, cmap_in)


# --------------------------------------------------------------------------
# Wrapper glue (jitted): mbstd, im2col layout prep, optional fromrgb.
# --------------------------------------------------------------------------
def _mbstd_concat(x, group_size, num_channels):
    if num_channels <= 0:
        return x
    N, C, H, W = x.shape
    G = min(group_size, N) if group_size is not None else N
    assert N % G == 0, f"minibatch-std requires N ({N}) divisible by group size ({G})"
    F = num_channels
    c = C // F
    y = x.reshape(G, -1, F, c, H, W)
    y = y - jnp.mean(y, axis=0)
    y = jnp.mean(jnp.square(y), axis=0)
    y = jnp.sqrt(y + 1e-8)
    y = jnp.mean(y, axis=(2, 3, 4))
    y = y.reshape(-1, F, 1, 1)
    y = jnp.tile(y, (G, 1, H, W))                    # == torch .repeat(G,1,H,W)
    return jnp.concatenate([x, y], axis=1)


def _epilogue_forward(params, x, img, cmap, *,
                      in_channels, cmap_dim, resolution, img_channels, architecture,
                      mbstd_group_size, mbstd_num_channels, conv_clamp):
    N = x.shape[0]
    R, C = resolution, in_channels
    x = x.astype(jnp.float32)

    if architecture == 'skip':
        # fromrgb: Conv2dLayer(img_channels -> C, k=1, lrelu) added to x (tiny wrapper glue).
        w_rgb = params['fromrgb_w'] * (1.0 / np.sqrt(img_channels))
        y = jnp.einsum('oi,nihw->nohw', w_rgb, img.astype(jnp.float32))
        y = y + params['fromrgb_b'][None, :, None, None]
        y = _lrelu(y) * _LRELU_GAIN
        x = x + y

    x = _mbstd_concat(x, mbstd_group_size, mbstd_num_channels)      # [N, C+F, R, R]
    cin1 = x.shape[1]

    # ---- layout plumbing: channels-last + zero pad + im2col, lane-padded K, bf16 ----
    # TODO(synk): gather the 9 taps inside kernel A to remove this im2col HBM blow-up.
    k9 = 9 * cin1
    k9p = _round_up(k9, 128)
    x_nhwc = jnp.transpose(x, (0, 2, 3, 1))
    xp = jnp.pad(x_nhwc, ((0, 0), (1, 1), (1, 1), (0, 0)))
    taps = [xp[:, dy:dy + R, dx:dx + R, :] for dy in range(3) for dx in range(3)]
    x_col = jnp.concatenate(taps, axis=-1).reshape(N * R * R, k9).astype(jnp.bfloat16)
    x_col = jnp.pad(x_col, ((0, 0), (0, k9p - k9)))

    act_clamp = None if conv_clamp is None else float(conv_clamp)   # forward(gain=1)
    vmem_cap = _vmem_capacity_bytes()
    budget = int(vmem_cap * 0.4)

    block_m = _choose_conv_rows(N * R * R, R * R, k9p, C, budget)
    feat = _conv_lrelu_pallas(x_col, params['w_col'], params['b_conv'],
                              act_gain=_LRELU_GAIN, act_clamp=act_clamp,
                              block_m=block_m, vmem_cap=vmem_cap)    # [N*R*R, C] bf16
    feat = feat.reshape(N, R * R * C)        # free reshape, (h, w, c) flatten order

    # ---- fused fc + lrelu + out + cmap projection ----
    K = R * R * C
    block_k, n_k = _choose_fc_ktiling(K, N, C, budget)
    K_pad = block_k * n_k
    wfc = params['wfc']
    if K_pad > K:                            # rare: zero-pad the reduction dim
        wfc = jnp.pad(wfc, ((0, K_pad - K), (0, 0)))
        feat = jnp.pad(feat, ((0, 0), (0, K_pad - K)))

    if cmap_dim > 0:
        cmap_in = cmap.astype(jnp.float32)
    else:
        cmap_in = jnp.zeros((N, 1), jnp.float32)    # unused dummy

    return _fc_head_pallas(feat, wfc, params['bfc'], params['wout'], params['bout'],
                           cmap_in, cmap_dim=cmap_dim, block_k=block_k, vmem_cap=vmem_cap)


# ------------------------------ Module glue --------------------------------
class DiscriminatorEpilogueJAX:
    def __init__(self, in_channels, cmap_dim, resolution, img_channels,
                 architecture='resnet', mbstd_group_size=4, mbstd_num_channels=1,
                 activation='lrelu', conv_clamp=None, *, key):
        assert architecture in ['orig', 'skip', 'resnet']
        assert activation == 'lrelu'
        self.in_channels = in_channels
        self.cmap_dim = cmap_dim
        self.resolution = resolution
        self.img_channels = img_channels
        self.architecture = architecture
        self.mbstd_group_size = mbstd_group_size
        self.mbstd_num_channels = mbstd_num_channels
        self.conv_clamp = conv_clamp

        k_conv, k_fc, k_out, k_rgb = jax.random.split(key, 4)
        R, C = resolution, in_channels
        cin1 = in_channels + mbstd_num_channels

        # ---- raw (PyTorch-equivalent) parameters, f32, used by the reference path ----
        self.conv_weight = jax.random.normal(k_conv, (C, cin1, 3, 3), jnp.float32)
        self.conv_bias = jnp.zeros((C,), jnp.float32)
        self.conv_weight_gain = 1.0 / np.sqrt(cin1 * 3 * 3)

        fc_in = C * R * R
        self.fc_weight = jax.random.normal(k_fc, (C, fc_in), jnp.float32)
        self.fc_bias = jnp.zeros((C,), jnp.float32)
        self.fc_weight_gain = 1.0 / np.sqrt(fc_in)

        out_features = 1 if cmap_dim == 0 else cmap_dim
        self.out_weight = jax.random.normal(k_out, (out_features, C), jnp.float32)
        self.out_bias = jnp.zeros((out_features,), jnp.float32)
        self.out_weight_gain = 1.0 / np.sqrt(C)

        if architecture == 'skip':
            self.fromrgb_weight = jax.random.normal(k_rgb, (C, img_channels), jnp.float32)
            self.fromrgb_bias = jnp.zeros((C,), jnp.float32)

        # ---- kernel-ready weights: reorder / scale / pad / cast ONCE and cache ----
        k9 = 9 * cin1
        k9p = _round_up(k9, 128)
        w_col = self.conv_weight * self.conv_weight_gain                  # (C, cin1, 3, 3)
        w_col = jnp.transpose(w_col, (2, 3, 1, 0)).reshape(k9, C)         # (kh, kw, cin) rows
        w_col = jnp.pad(w_col, ((0, k9p - k9), (0, 0))).astype(jnp.bfloat16)

        # fc weight: PyTorch (c,h,w)-flatten input order -> (h,w,c) so the conv activations
        # never need an NHWC->NCHW transpose; then transpose to (K, C). Done once, cached.
        wfc = (self.fc_weight * self.fc_weight_gain).reshape(C, C, R, R)
        wfc = wfc.transpose(0, 2, 3, 1).reshape(C, R * R * C).T.astype(jnp.bfloat16)

        params = dict(
            w_col=w_col,
            b_conv=self.conv_bias.reshape(1, C),
            wfc=wfc,
            bfc=self.fc_bias.reshape(1, C),
            wout=(self.out_weight * self.out_weight_gain).T.astype(jnp.bfloat16),
            bout=self.out_bias.reshape(1, -1),
        )
        if architecture == 'skip':
            params['fromrgb_w'] = self.fromrgb_weight
            params['fromrgb_b'] = self.fromrgb_bias
        self._params = params

        self._fwd = jax.jit(functools.partial(
            _epilogue_forward,
            in_channels=in_channels, cmap_dim=cmap_dim, resolution=resolution,
            img_channels=img_channels, architecture=architecture,
            mbstd_group_size=mbstd_group_size, mbstd_num_channels=mbstd_num_channels,
            conv_clamp=conv_clamp))

    # ---------------------------- Pallas forward ----------------------------
    def forward(self, x, img=None, cmap=None):
        return self._fwd(self._params, x, img, cmap)

    # --------------- independent pure-JAX f32 reference (NCHW) ---------------
    def forward_ref(self, x, img=None, cmap=None):
        N = x.shape[0]
        x = x.astype(jnp.float32)
        if self.architecture == 'skip':
            w_rgb = self.fromrgb_weight * (1.0 / np.sqrt(self.img_channels))
            y = jnp.einsum('oi,nihw->nohw', w_rgb, img.astype(jnp.float32))
            y = y + self.fromrgb_bias[None, :, None, None]
            y = _lrelu(y) * _LRELU_GAIN
            x = x + y
        x = _mbstd_concat(x, self.mbstd_group_size, self.mbstd_num_channels)
        w = self.conv_weight * self.conv_weight_gain
        y = jax.lax.conv_general_dilated(
            x, w, window_strides=(1, 1), padding=((1, 1), (1, 1)),
            dimension_numbers=('NCHW', 'OIHW', 'NCHW'))
        y = y + self.conv_bias[None, :, None, None]
        y = _lrelu(y) * _LRELU_GAIN
        if self.conv_clamp is not None:
            y = jnp.clip(y, -self.conv_clamp, self.conv_clamp)
        h = y.reshape(N, -1)                              # NCHW (c,h,w) flatten
        h = h @ (self.fc_weight * self.fc_weight_gain).T + self.fc_bias
        h = _lrelu(h) * _LRELU_GAIN
        z = h @ (self.out_weight * self.out_weight_gain).T + self.out_bias
        if self.cmap_dim > 0:
            z = jnp.sum(z * cmap.astype(jnp.float32), axis=1, keepdims=True) \
                * (1.0 / np.sqrt(self.cmap_dim))
        return z


if __name__ == "__main__":
    key = jax.random.PRNGKey(0)
    k_params, kx, kc = jax.random.split(key, 3)

    # small shapes: batch=2, in_channels=4, resolution=16, cmap_dim=8, img_channels=3
    in_channels, cmap_dim, resolution, img_channels = 4, 8, 16, 3
    mod = DiscriminatorEpilogueJAX(in_channels, cmap_dim, resolution, img_channels,
                                   architecture='resnet', mbstd_group_size=4,
                                   mbstd_num_channels=1, conv_clamp=None, key=k_params)

    N = 2
    x = jax.random.normal(kx, (N, in_channels, resolution, resolution), jnp.float32)
    cmap = jax.random.normal(kc, (N, cmap_dim), jnp.float32)

    out = jax.block_until_ready(mod.forward(x, None, cmap))
    ref = jax.block_until_ready(mod.forward_ref(x, None, cmap))

    assert out.shape == (N, 1), out.shape
    # Kernels feed the MXU bf16 operands (per perf guidance); reference is pure f32,
    # so the tolerance is set at ~bf16 round-off level.
    err = float(np.max(np.abs(np.asarray(out) - np.asarray(ref))))
    assert np.allclose(np.asarray(out), np.asarray(ref), rtol=5e-2, atol=5e-2), err
    print("KERNEL_OK")
</pallas_src>

<mosaic_0001>
module attributes {stable_mosaic.version = 11 : i64} {
  func.func @_conv_lrelu_kernel(%arg0: i32, %arg1: memref<512x128xbf16, #tpu.memory_space<vmem>>, %arg2: memref<128x4xbf16, #tpu.memory_space<vmem>>, %arg3: memref<1x4xf32, #tpu.memory_space<vmem>>, %arg4: memref<512x4xbf16, #tpu.memory_space<vmem>>) attributes {dimension_semantics = [#tpu.dimension_semantics<parallel>], iteration_bounds = array<i64: 1>, scalar_prefetch = 0 : i64, scratch_operands = 0 : i64, tpu.core_type = #tpu.core_type<tc>, window_params = [{transform_indices = @transform_0, window_bounds = array<i64: 512, 128>}, {pipeline_mode = #tpu.pipeline_mode<synchronous>, transform_indices = @transform_1, window_bounds = array<i64: 128, 4>}, {pipeline_mode = #tpu.pipeline_mode<synchronous>, transform_indices = @transform_2, window_bounds = array<i64: 1, 4>}, {transform_indices = @transform_3, window_bounds = array<i64: 512, 4>}]} {
    %c0 = arith.constant 0 : index
    %c0_0 = arith.constant 0 : index
    %0 = vector.load %arg1[%c0, %c0_0] : memref<512x128xbf16, #tpu.memory_space<vmem>>, vector<512x128xbf16>
    %c0_1 = arith.constant 0 : index
    %c0_2 = arith.constant 0 : index
    %1 = vector.load %arg2[%c0_1, %c0_2] : memref<128x4xbf16, #tpu.memory_space<vmem>>, vector<128x4xbf16>
    %cst = arith.constant dense<0.000000e+00> : vector<512x4xf32>
    %2 = tpu.matmul %0, %1, %cst {dimension_numbers = #tpu.dot_dimension_numbers<[1], [0], [0], [1], [0, 0, 1, 1], [], []>} : vector<512x128xbf16>, vector<128x4xbf16>, vector<512x4xf32> -> vector<512x4xf32>
    %c0_3 = arith.constant 0 : index
    %c0_4 = arith.constant 0 : index
    %3 = vector.load %arg3[%c0_3, %c0_4] : memref<1x4xf32, #tpu.memory_space<vmem>>, vector<1x4xf32>
    %4 = vector.broadcast %3 : vector<1x4xf32> to vector<512x4xf32>
    %5 = arith.addf %2, %4 : vector<512x4xf32>
    %cst_5 = arith.constant 0.000000e+00 : f32
    %6 = vector.broadcast %cst_5 : f32 to vector<512x4xf32>
    %7 = arith.cmpf oge, %5, %6 : vector<512x4xf32>
    %cst_6 = arith.constant 2.000000e-01 : f32
    %8 = vector.broadcast %cst_6 : f32 to vector<512x4xf32>
    %9 = arith.mulf %8, %5 : vector<512x4xf32>
    %10 = arith.select %7, %5, %9 : vector<512x4xi1>, vector<512x4xf32>
    %cst_7 = arith.constant 1.41421354 : f32
    %11 = vector.broadcast %cst_7 : f32 to vector<512x4xf32>
    %12 = arith.mulf %10, %11 : vector<512x4xf32>
    %13 = arith.truncf %12 : vector<512x4xf32> to vector<512x4xbf16>
    %c0_8 = arith.constant 0 : index
    %c0_9 = arith.constant 0 : index
    %14 = vector.load %arg4[%c0_8, %c0_9] : memref<512x4xbf16, #tpu.memory_space<vmem>>, vector<512x4xbf16>
    tpu.vector_store %arg4[%c0_8, %c0_9], %13 {strides = array<i32>} : memref<512x4xbf16, #tpu.memory_space<vmem>>, vector<512x4xbf16>,
    return
  }
  func.func @transform_0(%arg0: i32) -> (i32, i32) {
    %c0_i32 = arith.constant 0 : i32
    %c0_i32_0 = arith.constant 0 : i32
    return %arg0, %c0_i32 : i32, i32
  }
  func.func @transform_1(%arg0: i32) -> (i32, i32) {
    %c0_i32 = arith.constant 0 : i32
    %c0_i32_0 = arith.constant 0 : i32
    %c0_i32_1 = arith.constant 0 : i32
    return %c0_i32, %c0_i32_0 : i32, i32
  }
  func.func @transform_2(%arg0: i32) -> (i32, i32) {
    %c0_i32 = arith.constant 0 : i32
    %c0_i32_0 = arith.constant 0 : i32
    %c0_i32_1 = arith.constant 0 : i32
    return %c0_i32, %c0_i32_0 : i32, i32
  }
  func.func @transform_3(%arg0: i32) -> (i32, i32) {
    %c0_i32 = arith.constant 0 : i32
    %c0_i32_0 = arith.constant 0 : i32
    return %arg0, %c0_i32 : i32, i32
  }
}

module attributes {stable_mosaic.version = 11 : i64} {
  func.func @_fc_head_kernel(%arg0: i32, %arg1: memref<2x1024xbf16, #tpu.memory_space<vmem>>, %arg2: memref<1024x4xbf16, #tpu.memory_space<vmem>>, %arg3: memref<1x4xf32, #tpu.memory_space<vmem>>, %arg4: memref<4x8xbf16, #tpu.memory_space<vmem>>, %arg5: memref<1x8xf32, #tpu.memory_space<vmem>>, %arg6: memref<2x8xf32, #tpu.memory_space<vmem>>, %arg7: memref<2x1xf32, #tpu.memory_space<vmem>>, %arg8: memref<2x4xf32, #tpu.memory_space<vmem>>) attributes {dimension_semantics = [#tpu.dimension_semantics<arbitrary>], iteration_bounds = array<i64: 1>, scalar_prefetch = 0 : i64, scratch_operands = 1 : i64, tpu.core_type = #tpu.core_type<tc>, window_params = [{transform_indices = @transform_0, window_bounds = array<i64: 2, 1024>}, {transform_indices = @transform_1, window_bounds = array<i64: 1024, 4>}, {pipeline_mode = #tpu.pipeline_mode<synchronous>, transform_indices = @transform_2, window_bounds = array<i64: 1, 4>}, {pipeline_mode = #tpu.pipeline_mode<synchronous>, transform_indices = @transform_3, window_bounds = array<i64: 4, 8>}, {pipeline_mode = #tpu.pipeline_mode<synchronous>, transform_indices = @transform_4, window_bounds = array<i64: 1, 8>}, {pipeline_mode = #tpu.pipeline_mode<synchronous>, transform_indices = @transform_5, window_bounds = array<i64: 2, 8>}, {pipeline_mode = #tpu.pipeline_mode<synchronous>, transform_indices = @transform_6, window_bounds = array<i64: 2, 1>}]} {
    %c0_i32 = arith.constant 0 : i32
    %0 = arith.cmpi eq, %arg0, %c0_i32 : i32
    %1 = arith.extui %0 : i1 to i32
    %c0_i32_0 = arith.constant 0 : i32
    %2 = arith.cmpi ne, %1, %c0_i32_0 : i32
    scf.if %2 {
      %cst_10 = arith.constant 0.000000e+00 : f32
      %12 = vector.broadcast %cst_10 : f32 to vector<2x4xf32>
      %c0_11 = arith.constant 0 : index
      %c0_12 = arith.constant 0 : index
      %13 = vector.load %arg8[%c0_11, %c0_12] : memref<2x4xf32, #tpu.memory_space<vmem>>, vector<2x4xf32>
      tpu.vector_store %arg8[%c0_11, %c0_12], %12 {strides = array<i32>} : memref<2x4xf32, #tpu.memory_space<vmem>>, vector<2x4xf32>,
    } else {
    }
    %c0 = arith.constant 0 : index
    %c0_1 = arith.constant 0 : index
    %3 = vector.load %arg8[%c0, %c0_1] : memref<2x4xf32, #tpu.memory_space<vmem>>, vector<2x4xf32>
    %c0_2 = arith.constant 0 : index
    %c0_3 = arith.constant 0 : index
    %4 = vector.load %arg1[%c0_2, %c0_3] : memref<2x1024xbf16, #tpu.memory_space<vmem>>, vector<2x1024xbf16>
    %c0_4 = arith.constant 0 : index
    %c0_5 = arith.constant 0 : index
    %5 = vector.load %arg2[%c0_4, %c0_5] : memref<1024x4xbf16, #tpu.memory_space<vmem>>, vector<1024x4xbf16>
    %cst = arith.constant dense<0.000000e+00> : vector<2x4xf32>
    %6 = tpu.matmul %4, %5, %cst {dimension_numbers = #tpu.dot_dimension_numbers<[1], [0], [0], [1], [0, 0, 1, 1], [], []>} : vector<2x1024xbf16>, vector<1024x4xbf16>, vector<2x4xf32> -> vector<2x4xf32>
    %7 = arith.addf %3, %6 : vector<2x4xf32>
    %c0_6 = arith.constant 0 : index
    %c0_7 = arith.constant 0 : index
    %8 = vector.load %arg8[%c0_6, %c0_7] : memref<2x4xf32, #tpu.memory_space<vmem>>, vector<2x4xf32>
    tpu.vector_store %arg8[%c0_6, %c0_7], %7 {strides = array<i32>} : memref<2x4xf32, #tpu.memory_space<vmem>>, vector<2x4xf32>,
    %c0_i32_8 = arith.constant 0 : i32
    %9 = arith.cmpi eq, %arg0, %c0_i32_8 : i32
    %10 = arith.extui %9 : i1 to i32
    %c0_i32_9 = arith.constant 0 : i32
    %11 = arith.cmpi ne, %10, %c0_i32_9 : i32
    scf.if %11 {
      %c0_10 = arith.constant 0 : index
      %c0_11 = arith.constant 0 : index
      %12 = vector.load %arg8[%c0_10, %c0_11] : memref<2x4xf32, #tpu.memory_space<vmem>>, vector<2x4xf32>
      %c0_12 = arith.constant 0 : index
      %c0_13 = arith.constant 0 : index
      %13 = vector.load %arg3[%c0_12, %c0_13] : memref<1x4xf32, #tpu.memory_space<vmem>>, vector<1x4xf32>
      %14 = vector.broadcast %13 : vector<1x4xf32> to vector<2x4xf32>
      %15 = arith.addf %12, %14 : vector<2x4xf32>
      %cst_14 = arith.constant 0.000000e+00 : f32
      %16 = vector.broadcast %cst_14 : f32 to vector<2x4xf32>
      %17 = arith.cmpf oge, %15, %16 : vector<2x4xf32>
      %cst_15 = arith.constant 2.000000e-01 : f32
      %18 = vector.broadcast %cst_15 : f32 to vector<2x4xf32>
      %19 = arith.mulf %18, %15 : vector<2x4xf32>
      %20 = arith.select %17, %15, %19 : vector<2x4xi1>, vector<2x4xf32>
      %cst_16 = arith.constant 1.41421354 : f32
      %21 = vector.broadcast %cst_16 : f32 to vector<2x4xf32>
      %22 = arith.mulf %20, %21 : vector<2x4xf32>
      %23 = arith.truncf %22 : vector<2x4xf32> to vector<2x4xbf16>
      %c0_17 = arith.constant 0 : index
      %c0_18 = arith.constant 0 : index
      %24 = vector.load %arg4[%c0_17, %c0_18] : memref<4x8xbf16, #tpu.memory_space<vmem>>, vector<4x8xbf16>
      %cst_19 = arith.constant dense<0.000000e+00> : vector<2x8xf32>
      %25 = tpu.matmul %23, %24, %cst_19 {dimension_numbers = #tpu.dot_dimension_numbers<[1], [0], [0], [1], [0, 0, 1, 1], [], []>} : vector<2x4xbf16>, vector<4x8xbf16>, vector<2x8xf32> -> vector<2x8xf32>
      %c0_20 = arith.constant 0 : index
      %c0_21 = arith.constant 0 : index
      %26 = vector.load %arg5[%c0_20, %c0_21] : memref<1x8xf32, #tpu.memory_space<vmem>>, vector<1x8xf32>
      %27 = vector.broadcast %26 : vector<1x8xf32> to vector<2x8xf32>
      %28 = arith.addf %25, %27 : vector<2x8xf32>
      %c0_22 = arith.constant 0 : index
      %c0_23 = arith.constant 0 : index
      %29 = vector.load %arg6[%c0_22, %c0_23] : memref<2x8xf32, #tpu.memory_space<vmem>>, vector<2x8xf32>
      %30 = arith.mulf %28, %29 : vector<2x8xf32>
      %cst_24 = arith.constant dense<0.000000e+00> : vector<2xf32>
      %31 = vector.multi_reduction <add>, %30, %cst_24 [1] : vector<2x8xf32> to vector<2xf32>
      %32 = vector.shape_cast %31 : vector<2xf32> to vector<2x1xf32>
      %cst_25 = arith.constant 0.353553385 : f32
      %33 = vector.broadcast %cst_25 : f32 to vector<2x1xf32>
      %34 = arith.mulf %32, %33 : vector<2x1xf32>
      %c0_26 = arith.constant 0 : index
      %c0_27 = arith.constant 0 : index
      %35 = vector.load %arg7[%c0_26, %c0_27] : memref<2x1xf32, #tpu.memory_space<vmem>>, vector<2x1xf32>
      tpu.vector_store %arg7[%c0_26, %c0_27], %34 {strides = array<i32>} : memref<2x1xf32, #tpu.memory_space<vmem>>, vector<2x1xf32>,
    } else {
    }
    return
  }
  func.func @transform_0(%arg0: i32) -> (i32, i32) {
    %c0_i32 = arith.constant 0 : i32
    %c0_i32_0 = arith.constant 0 : i32
    return %c0_i32, %arg0 : i32, i32
  }
  func.func @transform_1(%arg0: i32) -> (i32, i32) {
    %c0_i32 = arith.constant 0 : i32
    %c0_i32_0 = arith.constant 0 : i32
    return %arg0, %c0_i32 : i32, i32
  }
  func.func @transform_2(%arg0: i32) -> (i32, i32) {
    %c0_i32 = arith.constant 0 : i32
    %c0_i32_0 = arith.constant 0 : i32
    %c0_i32_1 = arith.constant 0 : i32
    return %c0_i32, %c0_i32_0 : i32, i32
  }
  func.func @transform_3(%arg0: i32) -> (i32, i32) {
    %c0_i32 = arith.constant 0 : i32
    %c0_i32_0 = arith.constant 0 : i32
    %c0_i32_1 = arith.constant 0 : i32
    return %c0_i32, %c0_i32_0 : i32, i32
  }
  func.func @transform_4(%arg0: i32) -> (i32, i32) {
    %c0_i32 = arith.constant 0 : i32
    %c0_i32_0 = arith.constant 0 : i32
    %c0_i32_1 = arith.constant 0 : i32
    return %c0_i32, %c0_i32_0 : i32, i32
  }
  func.func @transform_5(%arg0: i32) -> (i32, i32) {
    %c0_i32 = arith.constant 0 : i32
    %c0_i32_0 = arith.constant 0 : i32
    %c0_i32_1 = arith.constant 0 : i32
    return %c0_i32, %c0_i32_0 : i32, i32
  }
  func.func @transform_6(%arg0: i32) -> (i32, i32) {
    %c0_i32 = arith.constant 0 : i32
    %c0_i32_0 = arith.constant 0 : i32
    %c0_i32_1 = arith.constant 0 : i32
    return %c0_i32, %c0_i32_0 : i32, i32
  }
}

</mosaic_0001>

<llo_original>
// kernel: _epilogue_forward.2
$region0: #{_epilogue_forward.2}
  #allocation0 [shape = 'u32[]', space=smem, size = 0x4, offset = 0x4, fixed_abs, tag = 'smem constant byte address 0x4 - core index']
  #allocation1 [shape = 'u32[144,128]{1,0:T(1,128)}', space=vmem, size = 0x12000, scoped, tag = 'internal scratch']
  %s0 = inlined_call_operand.vmem [shape: bf16[512,128], index: 0, kind: input, shape index: {}]
  %s1 = inlined_call_operand.vmem [shape: bf16[128,4], index: 1, kind: input, shape index: {}]
  %s2 = inlined_call_operand.vmem [shape: f32[1,4], index: 2, kind: input, shape index: {}]
  %s3 = inlined_call_operand.vmem [shape: bf16[512,4], index: 3, kind: output, shape index: {}]
  %s4 = sld [smem:[#allocation0]]
  $region22: #{_epilogue_forward.2} parent=0
    _
  %s6 = ssub.s32 1, %s4
  %s7 = scalar_select 0, %s6, %s4
  // Predicated region
  $region2: #{_epilogue_forward.2} parent=0 // pred_check
    _
  $region3: #{_epilogue_forward.2} parent=0 // pred_check_branch
    %9 = sbr.rel (0) target = $region5
  $region4: #{_epilogue_forward.2} parent=0 // pred_region
    _
  $region5: #{_epilogue_forward.2} parent=0 // pred_fallthru
    _
  // Predicated region
  $region6: #{_epilogue_forward.2} parent=0 // pred_check
    _
  $region7: #{_epilogue_forward.2} parent=0 // pred_check_branch
    %11 = sbr.rel (0) target = $region9
  $region8: #{_epilogue_forward.2} parent=0 // pred_region
    _
  $region9: #{_epilogue_forward.2} parent=0 // pred_fallthru
    _
  // Predicated region
  $region10: #{_epilogue_forward.2} parent=0 // pred_check
    _
  $region11: #{_epilogue_forward.2} parent=0 // pred_check_branch
    %13 = sbr.rel (0) target = $region13
  $region12: #{_epilogue_forward.2} parent=0 // pred_region
    _
  $region13: #{_epilogue_forward.2} parent=0 // pred_fallthru
    _
  %v15 = vld [vmem:[%s0] sm:$0xf]
  %v16 = vld [vmem:[%s0 + $0x4] sm:$0xf]
  %v17 = vld [vmem:[%s0 + $0x8] sm:$0xf]
  %v18 = vld [vmem:[%s0 + $0xc] sm:$0xf]
  %v19 = vld [vmem:[%s0 + $0x10] sm:$0xf]
  %v20 = vld [vmem:[%s0 + $0x14] sm:$0xf]
  %v21 = vld [vmem:[%s0 + $0x18] sm:$0xf]
  %v22 = vld [vmem:[%s0 + $0x1c] sm:$0xf]
  %v23 = vld [vmem:[%s0 + $0x20] sm:$0xf]
  %v24 = vld [vmem:[%s0 + $0x24] sm:$0xf]
  %v25 = vld [vmem:[%s0 + $0x28] sm:$0xf]
  %v26 = vld [vmem:[%s0 + $0x2c] sm:$0xf]
  %v27 = vld [vmem:[%s0 + $0x30] sm:$0xf]
  %v28 = vld [vmem:[%s0 + $0x34] sm:$0xf]
  %v29 = vld [vmem:[%s0 + $0x38] sm:$0xf]
  %v30 = vld [vmem:[%s0 + $0x3c] sm:$0xf]
  %v31 = vld [vmem:[%s0 + $0x40] sm:$0xf]
  %v32 = vld [vmem:[%s0 + $0x44] sm:$0xf]
  %v33 = vld [vmem:[%s0 + $0x48] sm:$0xf]
  %v34 = vld [vmem:[%s0 + $0x4c] sm:$0xf]
  %v35 = vld [vmem:[%s0 + $0x50] sm:$0xf]
  %v36 = vld [vmem:[%s0 + $0x54] sm:$0xf]
  %v37 = vld [vmem:[%s0 + $0x58] sm:$0xf]
  %v38 = vld [vmem:[%s0 + $0x5c] sm:$0xf]
  %v39 = vld [vmem:[%s0 + $0x60] sm:$0xf]
  %v40 = vld [vmem:[%s0 + $0x64] sm:$0xf]
  %v41 = vld [vmem:[%s0 + $0x68] sm:$0xf]
  %v42 = vld [vmem:[%s0 + $0x6c] sm:$0xf]
  %v43 = vld [vmem:[%s0 + $0x70] sm:$0xf]
  %v44 = vld [vmem:[%s0 + $0x74] sm:$0xf]
  %v45 = vld [vmem:[%s0 + $0x78] sm:$0xf]
  %v46 = vld [vmem:[%s0 + $0x7c] sm:$0xf]
  %v47 = vld [vmem:[%s0 + $0x80] sm:$0xf]
  %v48 = vld [vmem:[%s0 + $0x84] sm:$0xf]
  %v49 = vld [vmem:[%s0 + $0x88] sm:$0xf]
  %v50 = vld [vmem:[%s0 + $0x8c] sm:$0xf]
  %v51 = vld [vmem:[%s0 + $0x90] sm:$0xf]
  %v52 = vld [vmem:[%s0 + $0x94] sm:$0xf]
  %v53 = vld [vmem:[%s0 + $0x98] sm:$0xf]
  %v54 = vld [vmem:[%s0 + $0x9c] sm:$0xf]
  %v55 = vld [vmem:[%s0 + $0xa0] sm:$0xf]
  %v56 = vld [vmem:[%s0 + $0xa4] sm:$0xf]
  %v57 = vld [vmem:[%s0 + $0xa8] sm:$0xf]
  %v58 = vld [vmem:[%s0 + $0xac] sm:$0xf]
  %v59 = vld [vmem:[%s0 + $0xb0] sm:$0xf]
  %v60 = vld [vmem:[%s0 + $0xb4] sm:$0xf]
  %v61 = vld [vmem:[%s0 + $0xb8] sm:$0xf]
  %v62 = vld [vmem:[%s0 + $0xbc] sm:$0xf]
  %v63 = vld [vmem:[%s0 + $0xc0] sm:$0xf]
  %v64 = vld [vmem:[%s0 + $0xc4] sm:$0xf]
  %v65 = vld [vmem:[%s0 + $0xc8] sm:$0xf]
  %v66 = vld [vmem:[%s0 + $0xcc] sm:$0xf]
  %v67 = vld [vmem:[%s0 + $0xd0] sm:$0xf]
  %v68 = vld [vmem:[%s0 + $0xd4] sm:$0xf]
  %v69 = vld [vmem:[%s0 + $0xd8] sm:$0xf]
  %v70 = vld [vmem:[%s0 + $0xdc] sm:$0xf]
  %v71 = vld [vmem:[%s0 + $0xe0] sm:$0xf]
  %v72 = vld [vmem:[%s0 + $0xe4] sm:$0xf]
  %v73 = vld [vmem:[%s0 + $0xe8] sm:$0xf]
  %v74 = vld [vmem:[%s0 + $0xec] sm:$0xf]
  %v75 = vld [vmem:[%s0 + $0xf0] sm:$0xf]
  %v76 = vld [vmem:[%s0 + $0xf4] sm:$0xf]
  %v77 = vld [vmem:[%s0 + $0xf8] sm:$0xf]
  %v78 = vld [vmem:[%s0 + $0xfc] sm:$0xf]
  %v79 = vld [vmem:[%s1] sm:$0xf]
  %v80 = vld [vmem:[%s1 + $0x4] sm:$0xf]
  %v81 = vld [vmem:[%s1 + $0x8] sm:$0xf]
  %v82 = vld [vmem:[%s1 + $0xc] sm:$0xf]
  %v83 = vld [vmem:[%s1 + $0x10] sm:$0xf]
  %v84 = vld [vmem:[%s1 + $0x14] sm:$0xf]
  %v85 = vld [vmem:[%s1 + $0x18] sm:$0xf]
  %v86 = vld [vmem:[%s1 + $0x1c] sm:$0xf]
  %v87 = vld [vmem:[%s1 + $0x20] sm:$0xf]
  %v88 = vld [vmem:[%s1 + $0x24] sm:$0xf]
  %v89 = vld [vmem:[%s1 + $0x28] sm:$0xf]
  %v90 = vld [vmem:[%s1 + $0x2c] sm:$0xf]
  %v91 = vld [vmem:[%s1 + $0x30] sm:$0xf]
  %v92 = vld [vmem:[%s1 + $0x34] sm:$0xf]
  %v93 = vld [vmem:[%s1 + $0x38] sm:$0xf]
  %v94 = vld [vmem:[%s1 + $0x3c] sm:$0xf]
  %v95 = vld [vmem:[%s2] sm:$0x1]
  %v97 = vlaneseq
  %v98 = vshrl.u32 %v97, 7
  %v99 = vsub.s32 0, %v98
  %v100 = vrot.slane %v95, %v99
  %v166 = vunpack.c.l.b16 %v15
  %v167 = vunpack.c.l.b16 %v16
  %v168 = vunpack.c.l.b16 %v17
  %v169 = vunpack.c.l.b16 %v18
  %v170 = vunpack.c.l.b16 %v19
  %v171 = vunpack.c.l.b16 %v20
  %v172 = vunpack.c.l.b16 %v21
  %v173 = vunpack.c.l.b16 %v22
  %v174 = vunpack.c.l.b16 %v23
  %v175 = vunpack.c.l.b16 %v24
  %v176 = vunpack.c.l.b16 %v25
  %v177 = vunpack.c.l.b16 %v26
  %v178 = vunpack.c.l.b16 %v27
  %v179 = vunpack.c.l.b16 %v28
  %v180 = vunpack.c.l.b16 %v29
  %v181 = vunpack.c.l.b16 %v30
  %v182 = vunpack.c.l.b16 %v31
  %v183 = vunpack.c.l.b16 %v32
  %v184 = vunpack.c.l.b16 %v33
  %v185 = vunpack.c.l.b16 %v34
  %v186 = vunpack.c.l.b16 %v35
  %v187 = vunpack.c.l.b16 %v36
  %v188 = vunpack.c.l.b16 %v37
  %v189 = vunpack.c.l.b16 %v38
  %v190 = vunpack.c.l.b16 %v39
  %v191 = vunpack.c.l.b16 %v40
  %v192 = vunpack.c.l.b16 %v41
  %v193 = vunpack.c.l.b16 %v42
  %v194 = vunpack.c.l.b16 %v43
  %v195 = vunpack.c.l.b16 %v44
  %v196 = vunpack.c.l.b16 %v45
  %v197 = vunpack.c.l.b16 %v46
  %v198 = vunpack.c.l.b16 %v47
  %v199 = vunpack.c.l.b16 %v48
  %v200 = vunpack.c.l.b16 %v49
  %v201 = vunpack.c.l.b16 %v50
  %v202 = vunpack.c.l.b16 %v51
  %v203 = vunpack.c.l.b16 %v52
  %v204 = vunpack.c.l.b16 %v53
  %v205 = vunpack.c.l.b16 %v54
  %v206 = vunpack.c.l.b16 %v55
  %v207 = vunpack.c.l.b16 %v56
  %v208 = vunpack.c.l.b16 %v57
  %v209 = vunpack.c.l.b16 %v58
  %v210 = vunpack.c.l.b16 %v59
  %v211 = vunpack.c.l.b16 %v60
  %v212 = vunpack.c.l.b16 %v61
  %v213 = vunpack.c.l.b16 %v62
  %v214 = vunpack.c.l.b16 %v63
  %v215 = vunpack.c.l.b16 %v64
  %v216 = vunpack.c.l.b16 %v65
  %v217 = vunpack.c.l.b16 %v66
  %v218 = vunpack.c.l.b16 %v67
  %v219 = vunpack.c.l.b16 %v68
  %v220 = vunpack.c.l.b16 %v69
  %v221 = vunpack.c.l.b16 %v70
  %v222 = vunpack.c.l.b16 %v71
  %v223 = vunpack.c.l.b16 %v72
  %v224 = vunpack.c.l.b16 %v73
  %v225 = vunpack.c.l.b16 %v74
  %v226 = vunpack.c.l.b16 %v75
  %v227 = vunpack.c.l.b16 %v76
  %v228 = vunpack.c.l.b16 %v77
  %v229 = vunpack.c.l.b16 %v78
  %v230 = vpack.c.b16 %v167, %v166
  %v231 = vpack.c.b16 %v169, %v168
  %v232 = vpack.c.b16 %v171, %v170
  %v233 = vpack.c.b16 %v173, %v172
  %v234 = vpack.c.b16 %v175, %v174
  %v235 = vpack.c.b16 %v177, %v176
  %v236 = vpack.c.b16 %v179, %v178
  %v237 = vpack.c.b16 %v181, %v180
  %v238 = vpack.c.b16 %v183, %v182
  %v239 = vpack.c.b16 %v185, %v184
  %v240 = vpack.c.b16 %v187, %v186
  %v241 = vpack.c.b16 %v189, %v188
  %v242 = vpack.c.b16 %v191, %v190
  %v243 = vpack.c.b16 %v193, %v192
  %v244 = vpack.c.b16 %v195, %v194
  %v245 = vpack.c.b16 %v197, %v196
  %v246 = vpack.c.b16 %v199, %v198
  %v247 = vpack.c.b16 %v201, %v200
  %v248 = vpack.c.b16 %v203, %v202
  %v249 = vpack.c.b16 %v205, %v204
  %v250 = vpack.c.b16 %v207, %v206
  %v251 = vpack.c.b16 %v209, %v208
  %v252 = vpack.c.b16 %v211, %v210
  %v253 = vpack.c.b16 %v213, %v212
  %v254 = vpack.c.b16 %v215, %v214
  %v255 = vpack.c.b16 %v217, %v216
  %v256 = vpack.c.b16 %v219, %v218
  %v257 = vpack.c.b16 %v221, %v220
  %v258 = vpack.c.b16 %v223, %v222
  %v259 = vpack.c.b16 %v225, %v224
  %v260 = vpack.c.b16 %v227, %v226
  %v261 = vpack.c.b16 %v229, %v228
  %v310 = vunpack.c.l.b16 %v79
  %v311 = vunpack.c.l.b16 %v80
  %v312 = vunpack.c.l.b16 %v81
  %v313 = vunpack.c.l.b16 %v82
  %v314 = vunpack.c.l.b16 %v83
  %v315 = vunpack.c.l.b16 %v84
  %v316 = vunpack.c.l.b16 %v85
  %v317 = vunpack.c.l.b16 %v86
  %v318 = vunpack.c.l.b16 %v87
  %v319 = vunpack.c.l.b16 %v88
  %v320 = vunpack.c.l.b16 %v89
  %v321 = vunpack.c.l.b16 %v90
  %v322 = vunpack.c.l.b16 %v91
  %v323 = vunpack.c.l.b16 %v92
  %v324 = vunpack.c.l.b16 %v93
  %v325 = vunpack.c.l.b16 %v94
  %v326 = vpack.c.b16 %v311, %v310
  %v327 = vpack.c.b16 %v313, %v312
  %v328 = vpack.c.b16 %v315, %v314
  %v329 = vpack.c.b16 %v317, %v316
  %v330 = vpack.c.b16 %v319, %v318
  %v331 = vpack.c.b16 %v321, %v320
  %v332 = vpack.c.b16 %v323, %v322
  %v333 = vpack.c.b16 %v325, %v324
  %342 = vmatprep.subr.bf16.mxu0 0
  %343 = vmatpush1.bf16.msra.mxu0 %v326
  %344 = vmatprep.subr.bf16.mxu0 0
  %345 = vmatpush1.bf16.msra.mxu0 %v327
  %346 = vmatprep.subr.bf16.mxu0 0
  %347 = vmatpush1.bf16.msra.mxu0 %v328
  %348 = vmatprep.subr.bf16.mxu0 0
  %349 = vmatpush1.bf16.msra.mxu0 %v329
  %350 = vmatprep.subr.bf16.mxu0 0
  %351 = vmatpush1.bf16.msra.mxu0 %v330
  %352 = vmatprep.subr.bf16.mxu0 0
  %353 = vmatpush1.bf16.msra.mxu0 %v331
  %354 = vmatprep.subr.bf16.mxu0 0
  %355 = vmatpush1.bf16.msra.mxu0 %v332
  %356 = vmatprep.subr.bf16.mxu0 0
  %357 = vmatpush1.bf16.msra.mxu0 %v333
  %358 = vmatprep.subr.bf16.mxu0 0
  %359 = vmatpush1.bf16.msra.mxu0 0
  %360 = vmatprep.subr.bf16.mxu0 0
  %361 = vmatpush1.bf16.msra.mxu0 0
  %362 = vmatprep.subr.bf16.mxu0 0
  %363 = vmatpush1.bf16.msra.mxu0 0
  %364 = vmatprep.subr.bf16.mxu0 0
  %365 = vmatpush1.bf16.msra.mxu0 0
  %366 = vmatprep.subr.bf16.mxu0 0
  %367 = vmatpush1.bf16.msra.mxu0 0
  %368 = vmatprep.subr.bf16.mxu0 0
  %369 = vmatpush1.bf16.msra.mxu0 0
  %370 = vmatprep.subr.bf16.mxu0 0
  %371 = vmatpush1.bf16.msra.mxu0 0
  %372 = vmatprep.subr.bf16.mxu0 0
  %373 = vmatpush1.bf16.msra.mxu0 0
  %374 = vmatprep.mubr.bf16.mxu0 0
  %375 = vmatmul.mubr.bf16.gmra.mrb[0].mxu0 %v230
  %v376 = vpop.f32.mrb[0].mxu0
  %v377 = vadd.f32 %v100, %v376
  %v378 = vpop.f32.mrb[0].mxu0
  %v379 = vpop.f32.mrb[0].mxu0
  %v380 = vadd.f32 %v100, %v379
  %v381 = vpop.f32.mrb[0].mxu0
  %382 = vmatprep.mubr.bf16.mxu0 0
  %383 = vmatmul.mubr.bf16.gmra.mrb[0].mxu0 %v231
  %v384 = vpop.f32.mrb[0].mxu0
  %v385 = vadd.f32 %v100, %v384
  %v386 = vpop.f32.mrb[0].mxu0
  %v387 = vpop.f32.mrb[0].mxu0
  %v388 = vadd.f32 %v100, %v387
  %v389 = vpop.f32.mrb[0].mxu0
  %390 = vmatprep.mubr.bf16.mxu0 0
  %391 = vmatmul.mubr.bf16.gmra.mrb[0].mxu0 %v232
  %v392 = vpop.f32.mrb[0].mxu0
  %v393 = vadd.f32 %v100, %v392
  %v394 = vpop.f32.mrb[0].mxu0
  %v395 = vpop.f32.mrb[0].mxu0
  %v396 = vadd.f32 %v100, %v395
  %v397 = vpop.f32.mrb[0].mxu0
  %398 = vmatprep.mubr.bf16.mxu0 0
  %399 = vmatmul.mubr.bf16.gmra.mrb[0].mxu0 %v233
  %v400 = vpop.f32.mrb[0].mxu0
  %v401 = vadd.f32 %v100, %v400
  %v402 = vpop.f32.mrb[0].mxu0
  %v403 = vpop.f32.mrb[0].mxu0
  %v404 = vadd.f32 %v100, %v403
  %v405 = vpop.f32.mrb[0].mxu0
  %406 = vmatprep.mubr.bf16.mxu0 0
  %407 = vmatmul.mubr.bf16.gmra.mrb[0].mxu0 %v234
  %v408 = vpop.f32.mrb[0].mxu0
  %v409 = vadd.f32 %v100, %v408
  %v410 = vpop.f32.mrb[0].mxu0
  %v411 = vpop.f32.mrb[0].mxu0
  %v412 = vadd.f32 %v100, %v411
  %v413 = vpop.f32.mrb[0].mxu0
  %414 = vmatprep.mubr.bf16.mxu0 0
  %415 = vmatmul.mubr.bf16.gmra.mrb[0].mxu0 %v235
  %v416 = vpop.f32.mrb[0].mxu0
  %v417 = vadd.f32 %v100, %v416
  %v418 = vpop.f32.mrb[0].mxu0
  %v419 = vpop.f32.mrb[0].mxu0
  %v420 = vadd.f32 %v100, %v419
  %v421 = vpop.f32.mrb[0].mxu0
  %422 = vmatprep.mubr.bf16.mxu0 0
  %423 = vmatmul.mubr.bf16.gmra.mrb[0].mxu0 %v236
  %v424 = vpop.f32.mrb[0].mxu0
  %v425 = vadd.f32 %v100, %v424
  %v426 = vpop.f32.mrb[0].mxu0
  %v427 = vpop.f32.mrb[0].mxu0
  %v428 = vadd.f32 %v100, %v427
  %v429 = vpop.f32.mrb[0].mxu0
  %430 = vmatprep.mubr.bf16.mxu0 0
  %431 = vmatmul.mubr.bf16.gmra.mrb[0].mxu0 %v237
  %v432 = vpop.f32.mrb[0].mxu0
  %v433 = vadd.f32 %v100, %v432
  %v434 = vpop.f32.mrb[0].mxu0
  %v435 = vpop.f32.mrb[0].mxu0
  %v436 = vadd.f32 %v100, %v435
  %v437 = vpop.f32.mrb[0].mxu0
  %438 = vmatprep.mubr.bf16.mxu0 0
  %439 = vmatmul.mubr.bf16.gmra.mrb[0].mxu0 %v238
  %v440 = vpop.f32.mrb[0].mxu0
  %v441 = vadd.f32 %v100, %v440
  %v442 = vpop.f32.mrb[0].mxu0
  %v443 = vpop.f32.mrb[0].mxu0
  %v444 = vadd.f32 %v100, %v443
  %v445 = vpop.f32.mrb[0].mxu0
  %446 = vmatprep.mubr.bf16.mxu0 0
  %447 = vmatmul.mubr.bf16.gmra.mrb[0].mxu0 %v239
  %v448 = vpop.f32.mrb[0].mxu0
  %v449 = vadd.f32 %v100, %v448
  %v450 = vpop.f32.mrb[0].mxu0
  %v451 = vpop.f32.mrb[0].mxu0
  %v452 = vadd.f32 %v100, %v451
  %v453 = vpop.f32.mrb[0].mxu0
  %454 = vmatprep.mubr.bf16.mxu0 0
  %455 = vmatmul.mubr.bf16.gmra.mrb[0].mxu0 %v240
  %v456 = vpop.f32.mrb[0].mxu0
  %v457 = vadd.f32 %v100, %v456
  %v458 = vpop.f32.mrb[0].mxu0
  %v459 = vpop.f32.mrb[0].mxu0
  %v460 = vadd.f32 %v100, %v459
  %v461 = vpop.f32.mrb[0].mxu0
  %462 = vmatprep.mubr.bf16.mxu0 0
  %463 = vmatmul.mubr.bf16.gmra.mrb[0].mxu0 %v241
  %v464 = vpop.f32.mrb[0].mxu0
  %v465 = vadd.f32 %v100, %v464
  %v466 = vpop.f32.mrb[0].mxu0
  %v467 = vpop.f32.mrb[0].mxu0
  %v468 = vadd.f32 %v100, %v467
  %v469 = vpop.f32.mrb[0].mxu0
  %470 = vmatprep.mubr.bf16.mxu0 0
  %471 = vmatmul.mubr.bf16.gmra.mrb[0].mxu0 %v242
  %v472 = vpop.f32.mrb[0].mxu0
  %v473 = vadd.f32 %v100, %v472
  %v474 = vpop.f32.mrb[0].mxu0
  %v475 = vpop.f32.mrb[0].mxu0
  %v476 = vadd.f32 %v100, %v475
  %v477 = vpop.f32.mrb[0].mxu0
  %478 = vmatprep.mubr.bf16.mxu0 0
  %479 = vmatmul.mubr.bf16.gmra.mrb[0].mxu0 %v243
  %v480 = vpop.f32.mrb[0].mxu0
  %v481 = vadd.f32 %v100, %v480
  %v482 = vpop.f32.mrb[0].mxu0
  %v483 = vpop.f32.mrb[0].mxu0
  %v484 = vadd.f32 %v100, %v483
  %v485 = vpop.f32.mrb[0].mxu0
  %486 = vmatprep.mubr.bf16.mxu0 0
  %487 = vmatmul.mubr.bf16.gmra.mrb[0].mxu0 %v244
  %v488 = vpop.f32.mrb[0].mxu0
  %v489 = vadd.f32 %v100, %v488
  %v490 = vpop.f32.mrb[0].mxu0
  %v491 = vpop.f32.mrb[0].mxu0
  %v492 = vadd.f32 %v100, %v491
  %v493 = vpop.f32.mrb[0].mxu0
  %494 = vmatprep.mubr.bf16.mxu0 0
  %495 = vmatmul.mubr.bf16.gmra.mrb[0].mxu0 %v245
  %v496 = vpop.f32.mrb[0].mxu0
  %v497 = vadd.f32 %v100, %v496
  %v498 = vpop.f32.mrb[0].mxu0
  %v499 = vpop.f32.mrb[0].mxu0
  %v500 = vadd.f32 %v100, %v499
  %v501 = vpop.f32.mrb[0].mxu0
  %502 = vmatprep.mubr.bf16.mxu0 0
  %503 = vmatmul.mubr.bf16.gmra.mrb[0].mxu0 %v246
  %v504 = vpop.f32.mrb[0].mxu0
  %v505 = vadd.f32 %v100, %v504
  %v506 = vpop.f32.mrb[0].mxu0
  %v507 = vpop.f32.mrb[0].mxu0
  %v508 = vadd.f32 %v100, %v507
  %v509 = vpop.f32.mrb[0].mxu0
  %510 = vmatprep.mubr.bf16.mxu0 0
  %511 = vmatmul.mubr.bf16.gmra.mrb[0].mxu0 %v247
  %v512 = vpop.f32.mrb[0].mxu0
  %v513 = vadd.f32 %v100, %v512
  %v514 = vpop.f32.mrb[0].mxu0
  %v515 = vpop.f32.mrb[0].mxu0
  %v516 = vadd.f32 %v100, %v515
  %v517 = vpop.f32.mrb[0].mxu0
  %518 = vmatprep.mubr.bf16.mxu0 0
  %519 = vmatmul.mubr.bf16.gmra.mrb[0].mxu0 %v248
  %v520 = vpop.f32.mrb[0].mxu0
  %v521 = vadd.f32 %v100, %v520
  %v522 = vpop.f32.mrb[0].mxu0
  %v523 = vpop.f32.mrb[0].mxu0
  %v524 = vadd.f32 %v100, %v523
  %v525 = vpop.f32.mrb[0].mxu0
  %526 = vmatprep.mubr.bf16.mxu0 0
  %527 = vmatmul.mubr.bf16.gmra.mrb[0].mxu0 %v249
  %v528 = vpop.f32.mrb[0].mxu0
  %v529 = vadd.f32 %v100, %v528
  %v530 = vpop.f32.mrb[0].mxu0
  %v531 = vpop.f32.mrb[0].mxu0
  %v532 = vadd.f32 %v100, %v531
  %v533 = vpop.f32.mrb[0].mxu0
  %534 = vmatprep.mubr.bf16.mxu0 0
  %535 = vmatmul.mubr.bf16.gmra.mrb[0].mxu0 %v250
  %v536 = vpop.f32.mrb[0].mxu0
  %v537 = vadd.f32 %v100, %v536
  %v538 = vpop.f32.mrb[0].mxu0
  %v539 = vpop.f32.mrb[0].mxu0
  %v540 = vadd.f32 %v100, %v539
  %v541 = vpop.f32.mrb[0].mxu0
  %542 = vmatprep.mubr.bf16.mxu0 0
  %543 = vmatmul.mubr.bf16.gmra.mrb[0].mxu0 %v251
  %v544 = vpop.f32.mrb[0].mxu0
  %v545 = vadd.f32 %v100, %v544
  %v546 = vpop.f32.mrb[0].mxu0
  %v547 = vpop.f32.mrb[0].mxu0
  %v548 = vadd.f32 %v100, %v547
  %v549 = vpop.f32.mrb[0].mxu0
  %550 = vmatprep.mubr.bf16.mxu0 0
  %551 = vmatmul.mubr.bf16.gmra.mrb[0].mxu0 %v252
  %v552 = vpop.f32.mrb[0].mxu0
  %v553 = vadd.f32 %v100, %v552
  %v554 = vpop.f32.mrb[0].mxu0
  %v555 = vpop.f32.mrb[0].mxu0
  %v556 = vadd.f32 %v100, %v555
  %v557 = vpop.f32.mrb[0].mxu0
  %558 = vmatprep.mubr.bf16.mxu0 0
  %559 = vmatmul.mubr.bf16.gmra.mrb[0].mxu0 %v253
  %v560 = vpop.f32.mrb[0].mxu0
  %v561 = vadd.f32 %v100, %v560
  %v562 = vpop.f32.mrb[0].mxu0
  %v563 = vpop.f32.mrb[0].mxu0
  %v564 = vadd.f32 %v100, %v563
  %v565 = vpop.f32.mrb[0].mxu0
  %566 = vmatprep.mubr.bf16.mxu0 0
  %567 = vmatmul.mubr.bf16.gmra.mrb[0].mxu0 %v254
  %v568 = vpop.f32.mrb[0].mxu0
  %v569 = vadd.f32 %v100, %v568
  %v570 = vpop.f32.mrb[0].mxu0
  %v571 = vpop.f32.mrb[0].mxu0
  %v572 = vadd.f32 %v100, %v571
  %v573 = vpop.f32.mrb[0].mxu0
  %574 = vmatprep.mubr.bf16.mxu0 0
  %575 = vmatmul.mubr.bf16.gmra.mrb[0].mxu0 %v255
  %v576 = vpop.f32.mrb[0].mxu0
  %v577 = vadd.f32 %v100, %v576
  %v578 = vpop.f32.mrb[0].mxu0
  %v579 = vpop.f32.mrb[0].mxu0
  %v580 = vadd.f32 %v100, %v579
  %v581 = vpop.f32.mrb[0].mxu0
  %582 = vmatprep.mubr.bf16.mxu0 0
  %583 = vmatmul.mubr.bf16.gmra.mrb[0].mxu0 %v256
  %v584 = vpop.f32.mrb[0].mxu0
  %v585 = vadd.f32 %v100, %v584
  %v586 = vpop.f32.mrb[0].mxu0
  %v587 = vpop.f32.mrb[0].mxu0
  %v588 = vadd.f32 %v100, %v587
  %v589 = vpop.f32.mrb[0].mxu0
  %590 = vmatprep.mubr.bf16.mxu0 0
  %591 = vmatmul.mubr.bf16.gmra.mrb[0].mxu0 %v257
  %v592 = vpop.f32.mrb[0].mxu0
  %v593 = vadd.f32 %v100, %v592
  %v594 = vpop.f32.mrb[0].mxu0
  %v595 = vpop.f32.mrb[0].mxu0
  %v596 = vadd.f32 %v100, %v595
  %v597 = vpop.f32.mrb[0].mxu0
  %598 = vmatprep.mubr.bf16.mxu0 0
  %599 = vmatmul.mubr.bf16.gmra.mrb[0].mxu0 %v258
  %v600 = vpop.f32.mrb[0].mxu0
  %v601 = vadd.f32 %v100, %v600
  %v602 = vpop.f32.mrb[0].mxu0
  %v603 = vpop.f32.mrb[0].mxu0
  %v604 = vadd.f32 %v100, %v603
  %v605 = vpop.f32.mrb[0].mxu0
  %606 = vmatprep.mubr.bf16.mxu0 0
  %607 = vmatmul.mubr.bf16.gmra.mrb[0].mxu0 %v259
  %v608 = vpop.f32.mrb[0].mxu0
  %v609 = vadd.f32 %v100, %v608
  %v610 = vpop.f32.mrb[0].mxu0
  %v611 = vpop.f32.mrb[0].mxu0
  %v612 = vadd.f32 %v100, %v611
  %v613 = vpop.f32.mrb[0].mxu0
  %614 = vmatprep.mubr.bf16.mxu0 0
  %615 = vmatmul.mubr.bf16.gmra.mrb[0].mxu0 %v260
  %v616 = vpop.f32.mrb[0].mxu0
  %v617 = vadd.f32 %v100, %v616
  %v618 = vpop.f32.mrb[0].mxu0
  %v619 = vpop.f32.mrb[0].mxu0
  %v620 = vadd.f32 %v100, %v619
  %v621 = vpop.f32.mrb[0].mxu0
  %622 = vmatprep.mubr.bf16.mxu0 0
  %623 = vmatmul.mubr.bf16.gmra.mrb[0].mxu0 %v261
  %v624 = vpop.f32.mrb[0].mxu0
  %v625 = vadd.f32 %v100, %v624
  %v626 = vpop.f32.mrb[0].mxu0
  %v627 = vpop.f32.mrb[0].mxu0
  %v628 = vadd.f32 %v100, %v627
  %v629 = vpop.f32.mrb[0].mxu0
  %630 = vdwg.mxu0
  %vm631 = vcmp.ge.f32.partialorder %v377, 0.0
  %vm632 = vcmp.ge.f32.partialorder %v380, 0.0
  %vm633 = vcmp.ge.f32.partialorder %v385, 0.0
  %vm634 = vcmp.ge.f32.partialorder %v388, 0.0
  %vm635 = vcmp.ge.f32.partialorder %v393, 0.0
  %vm636 = vcmp.ge.f32.partialorder %v396, 0.0
  %vm637 = vcmp.ge.f32.partialorder %v401, 0.0
  %vm638 = vcmp.ge.f32.partialorder %v404, 0.0
  %vm639 = vcmp.ge.f32.partialorder %v409, 0.0
  %vm640 = vcmp.ge.f32.partialorder %v412, 0.0
  %vm641 = vcmp.ge.f32.partialorder %v417, 0.0
  %vm642 = vcmp.ge.f32.partialorder %v420, 0.0
  %vm643 = vcmp.ge.f32.partialorder %v425, 0.0
  %vm644 = vcmp.ge.f32.partialorder %v428, 0.0
  %vm645 = vcmp.ge.f32.partialorder %v433, 0.0
  %vm646 = vcmp.ge.f32.partialorder %v436, 0.0
  %vm647 = vcmp.ge.f32.partialorder %v441, 0.0
  %vm648 = vcmp.ge.f32.partialorder %v444, 0.0
  %vm649 = vcmp.ge.f32.partialorder %v449, 0.0
  %vm650 = vcmp.ge.f32.partialorder %v452, 0.0
  %vm651 = vcmp.ge.f32.partialorder %v457, 0.0
  %vm652 = vcmp.ge.f32.partialorder %v460, 0.0
  %vm653 = vcmp.ge.f32.partialorder %v465, 0.0
  %vm654 = vcmp.ge.f32.partialorder %v468, 0.0
  %vm655 = vcmp.ge.f32.partialorder %v473, 0.0
  %vm656 = vcmp.ge.f32.partialorder %v476, 0.0
  %vm657 = vcmp.ge.f32.partialorder %v481, 0.0
  %vm658 = vcmp.ge.f32.partialorder %v484, 0.0
  %vm659 = vcmp.ge.f32.partialorder %v489, 0.0
  %vm660 = vcmp.ge.f32.partialorder %v492, 0.0
  %vm661 = vcmp.ge.f32.partialorder %v497, 0.0
  %vm662 = vcmp.ge.f32.partialorder %v500, 0.0
  %vm663 = vcmp.ge.f32.partialorder %v505, 0.0
  %vm664 = vcmp.ge.f32.partialorder %v508, 0.0
  %vm665 = vcmp.ge.f32.partialorder %v513, 0.0
  %vm666 = vcmp.ge.f32.partialorder %v516, 0.0
  %vm667 = vcmp.ge.f32.partialorder %v521, 0.0
  %vm668 = vcmp.ge.f32.partialorder %v524, 0.0
  %vm669 = vcmp.ge.f32.partialorder %v529, 0.0
  %vm670 = vcmp.ge.f32.partialorder %v532, 0.0
  %vm671 = vcmp.ge.f32.partialorder %v537, 0.0
  %vm672 = vcmp.ge.f32.partialorder %v540, 0.0
  %vm673 = vcmp.ge.f32.partialorder %v545, 0.0
  %vm674 = vcmp.ge.f32.partialorder %v548, 0.0
  %vm675 = vcmp.ge.f32.partialorder %v553, 0.0
  %vm676 = vcmp.ge.f32.partialorder %v556, 0.0
  %vm677 = vcmp.ge.f32.partialorder %v561, 0.0
  %vm678 = vcmp.ge.f32.partialorder %v564, 0.0
  %vm679 = vcmp.ge.f32.partialorder %v569, 0.0
  %vm680 = vcmp.ge.f32.partialorder %v572, 0.0
  %vm681 = vcmp.ge.f32.partialorder %v577, 0.0
  %vm682 = vcmp.ge.f32.partialorder %v580, 0.0
  %vm683 = vcmp.ge.f32.partialorder %v585, 0.0
  %vm684 = vcmp.ge.f32.partialorder %v588, 0.0
  %vm685 = vcmp.ge.f32.partialorder %v593, 0.0
  %vm686 = vcmp.ge.f32.partialorder %v596, 0.0
  %vm687 = vcmp.ge.f32.partialorder %v601, 0.0
  %vm688 = vcmp.ge.f32.partialorder %v604, 0.0
  %vm689 = vcmp.ge.f32.partialorder %v609, 0.0
  %vm690 = vcmp.ge.f32.partialorder %v612, 0.0
  %vm691 = vcmp.ge.f32.partialorder %v617, 0.0
  %vm692 = vcmp.ge.f32.partialorder %v620, 0.0
  %vm693 = vcmp.ge.f32.partialorder %v625, 0.0
  %vm694 = vcmp.ge.f32.partialorder %v628, 0.0
  %v695 = vmul.f32 %v377, 0.2
  %v696 = vmul.f32 %v380, 0.2
  %v697 = vmul.f32 %v385, 0.2
  %v698 = vmul.f32 %v388, 0.2
  %v699 = vmul.f32 %v393, 0.2
  %v700 = vmul.f32 %v396, 0.2
  %v701 = vmul.f32 %v401, 0.2
  %v702 = vmul.f32 %v404, 0.2
  %v703 = vmul.f32 %v409, 0.2
  %v704 = vmul.f32 %v412, 0.2
  %v705 = vmul.f32 %v417, 0.2
  %v706 = vmul.f32 %v420, 0.2
  %v707 = vmul.f32 %v425, 0.2
  %v708 = vmul.f32 %v428, 0.2
  %v709 = vmul.f32 %v433, 0.2
  %v710 = vmul.f32 %v436, 0.2
  %v711 = vmul.f32 %v441, 0.2
  %v712 = vmul.f32 %v444, 0.2
  %v713 = vmul.f32 %v449, 0.2
  %v714 = vmul.f32 %v452, 0.2
  %v715 = vmul.f32 %v457, 0.2
  %v716 = vmul.f32 %v460, 0.2
  %v717 = vmul.f32 %v465, 0.2
  %v718 = vmul.f32 %v468, 0.2
  %v719 = vmul.f32 %v473, 0.2
  %v720 = vmul.f32 %v476, 0.2
  %v721 = vmul.f32 %v481, 0.2
  %v722 = vmul.f32 %v484, 0.2
  %v723 = vmul.f32 %v489, 0.2
  %v724 = vmul.f32 %v492, 0.2
  %v725 = vmul.f32 %v497, 0.2
  %v726 = vmul.f32 %v500, 0.2
  %v727 = vmul.f32 %v505, 0.2
  %v728 = vmul.f32 %v508, 0.2
  %v729 = vmul.f32 %v513, 0.2
  %v730 = vmul.f32 %v516, 0.2
  %v731 = vmul.f32 %v521, 0.2
  %v732 = vmul.f32 %v524, 0.2
  %v733 = vmul.f32 %v529, 0.2
  %v734 = vmul.f32 %v532, 0.2
  %v735 = vmul.f32 %v537, 0.2
  %v736 = vmul.f32 %v540, 0.2
  %v737 = vmul.f32 %v545, 0.2
  %v738 = vmul.f32 %v548, 0.2
  %v739 = vmul.f32 %v553, 0.2
  %v740 = vmul.f32 %v556, 0.2
  %v741 = vmul.f32 %v561, 0.2
  %v742 = vmul.f32 %v564, 0.2
  %v743 = vmul.f32 %v569, 0.2
  %v744 = vmul.f32 %v572, 0.2
  %v745 = vmul.f32 %v577, 0.2
  %v746 = vmul.f32 %v580, 0.2
  %v747 = vmul.f32 %v585, 0.2
  %v748 = vmul.f32 %v588, 0.2
  %v749 = vmul.f32 %v593, 0.2
  %v750 = vmul.f32 %v596, 0.2
  %v751 = vmul.f32 %v601, 0.2
  %v752 = vmul.f32 %v604, 0.2
  %v753 = vmul.f32 %v609, 0.2
  %v754 = vmul.f32 %v612, 0.2
  %v755 = vmul.f32 %v617, 0.2
  %v756 = vmul.f32 %v620, 0.2
  %v757 = vmul.f32 %v625, 0.2
  %v758 = vmul.f32 %v628, 0.2
  %v759 = vsel %vm631, %v377, %v695
  %v760 = vsel %vm632, %v380, %v696
  %v761 = vsel %vm633, %v385, %v697
  %v762 = vsel %vm634, %v388, %v698
  %v763 = vsel %vm635, %v393, %v699
  %v764 = vsel %vm636, %v396, %v700
  %v765 = vsel %vm637, %v401, %v701
  %v766 = vsel %vm638, %v404, %v702
  %v767 = vsel %vm639, %v409, %v703
  %v768 = vsel %vm640, %v412, %v704
  %v769 = vsel %vm641, %v417, %v705
  %v770 = vsel %vm642, %v420, %v706
  %v771 = vsel %vm643, %v425, %v707
  %v772 = vsel %vm644, %v428, %v708
  %v773 = vsel %vm645, %v433, %v709
  %v774 = vsel %vm646, %v436, %v710
  %v775 = vsel %vm647, %v441, %v711
  %v776 = vsel %vm648, %v444, %v712
  %v777 = vsel %vm649, %v449, %v713
  %v778 = vsel %vm650, %v452, %v714
  %v779 = vsel %vm651, %v457, %v715
  %v780 = vsel %vm652, %v460, %v716
  %v781 = vsel %vm653, %v465, %v717
  %v782 = vsel %vm654, %v468, %v718
  %v783 = vsel %vm655, %v473, %v719
  %v784 = vsel %vm656, %v476, %v720
  %v785 = vsel %vm657, %v481, %v721
  %v786 = vsel %vm658, %v484, %v722
  %v787 = vsel %vm659, %v489, %v723
  %v788 = vsel %vm660, %v492, %v724
  %v789 = vsel %vm661, %v497, %v725
  %v790 = vsel %vm662, %v500, %v726
  %v791 = vsel %vm663, %v505, %v727
  %v792 = vsel %vm664, %v508, %v728
  %v793 = vsel %vm665, %v513, %v729
  %v794 = vsel %vm666, %v516, %v730
  %v795 = vsel %vm667, %v521, %v731
  %v796 = vsel %vm668, %v524, %v732
  %v797 = vsel %vm669, %v529, %v733
  %v798 = vsel %vm670, %v532, %v734
  %v799 = vsel %vm671, %v537, %v735
  %v800 = vsel %vm672, %v540, %v736
  %v801 = vsel %vm673, %v545, %v737
  %v802 = vsel %vm674, %v548, %v738
  %v803 = vsel %vm675, %v553, %v739
  %v804 = vsel %vm676, %v556, %v740
  %v805 = vsel %vm677, %v561, %v741
  %v806 = vsel %vm678, %v564, %v742
  %v807 = vsel %vm679, %v569, %v743
  %v808 = vsel %vm680, %v572, %v744
  %v809 = vsel %vm681, %v577, %v745
  %v810 = vsel %vm682, %v580, %v746
  %v811 = vsel %vm683, %v585, %v747
  %v812 = vsel %vm684, %v588, %v748
  %v813 = vsel %vm685, %v593, %v749
  %v814 = vsel %vm686, %v596, %v750
  %v815 = vsel %vm687, %v601, %v751
  %v816 = vsel %vm688, %v604, %v752
  %v817 = vsel %vm689, %v609, %v753
  %v818 = vsel %vm690, %v612, %v754
  %v819 = vsel %vm691, %v617, %v755
  %v820 = vsel %vm692, %v620, %v756
  %v821 = vsel %vm693, %v625, %v757
  %v822 = vsel %vm694, %v628, %v758
  %v823 = vmul.f32 %v759, 1.4142135
  %v824 = vmul.f32 %v760, 1.4142135
  %v825 = vmul.f32 %v761, 1.4142135
  %v826 = vmul.f32 %v762, 1.4142135
  %v827 = vmul.f32 %v763, 1.4142135
  %v828 = vmul.f32 %v764, 1.4142135
  %v829 = vmul.f32 %v765, 1.4142135
  %v830 = vmul.f32 %v766, 1.4142135
  %v831 = vmul.f32 %v767, 1.4142135
  %v832 = vmul.f32 %v768, 1.4142135
  %v833 = vmul.f32 %v769, 1.4142135
  %v834 = vmul.f32 %v770, 1.4142135
  %v835 = vmul.f32 %v771, 1.4142135
  %v836 = vmul.f32 %v772, 1.4142135
  %v837 = vmul.f32 %v773, 1.4142135
  %v838 = vmul.f32 %v774, 1.4142135
  %v839 = vmul.f32 %v775, 1.4142135
  %v840 = vmul.f32 %v776, 1.4142135
  %v841 = vmul.f32 %v777, 1.4142135
  %v842 = vmul.f32 %v778, 1.4142135
  %v843 = vmul.f32 %v779, 1.4142135
  %v844 = vmul.f32 %v780, 1.4142135
  %v845 = vmul.f32 %v781, 1.4142135
  %v846 = vmul.f32 %v782, 1.4142135
  %v847 = vmul.f32 %v783, 1.4142135
  %v848 = vmul.f32 %v784, 1.4142135
  %v849 = vmul.f32 %v785, 1.4142135
  %v850 = vmul.f32 %v786, 1.4142135
  %v851 = vmul.f32 %v787, 1.4142135
  %v852 = vmul.f32 %v788, 1.4142135
  %v853 = vmul.f32 %v789, 1.4142135
  %v854 = vmul.f32 %v790, 1.4142135
  %v855 = vmul.f32 %v791, 1.4142135
  %v856 = vmul.f32 %v792, 1.4142135
  %v857 = vmul.f32 %v793, 1.4142135
  %v858 = vmul.f32 %v794, 1.4142135
  %v859 = vmul.f32 %v795, 1.4142135
  %v860 = vmul.f32 %v796, 1.4142135
  %v861 = vmul.f32 %v797, 1.4142135
  %v862 = vmul.f32 %v798, 1.4142135
  %v863 = vmul.f32 %v799, 1.4142135
  %v864 = vmul.f32 %v800, 1.4142135
  %v865 = vmul.f32 %v801, 1.4142135
  %v866 = vmul.f32 %v802, 1.4142135
  %v867 = vmul.f32 %v803, 1.4142135
  %v868 = vmul.f32 %v804, 1.4142135
  %v869 = vmul.f32 %v805, 1.4142135
  %v870 = vmul.f32 %v806, 1.4142135
  %v871 = vmul.f32 %v807, 1.4142135
  %v872 = vmul.f32 %v808, 1.4142135
  %v873 = vmul.f32 %v809, 1.4142135
  %v874 = vmul.f32 %v810, 1.4142135
  %v875 = vmul.f32 %v811, 1.4142135
  %v876 = vmul.f32 %v812, 1.4142135
  %v877 = vmul.f32 %v813, 1.4142135
  %v878 = vmul.f32 %v814, 1.4142135
  %v879 = vmul.f32 %v815, 1.4142135
  %v880 = vmul.f32 %v816, 1.4142135
  %v881 = vmul.f32 %v817, 1.4142135
  %v882 = vmul.f32 %v818, 1.4142135
  %v883 = vmul.f32 %v819, 1.4142135
  %v884 = vmul.f32 %v820, 1.4142135
  %v885 = vmul.f32 %v821, 1.4142135
  %v886 = vmul.f32 %v822, 1.4142135
  %v887 = vpack.c.bf16 %v824, %v823
  %v888 = vpack.c.bf16 %v826, %v825
  %v889 = vpack.c.bf16 %v828, %v827
  %v890 = vpack.c.bf16 %v830, %v829
  %v891 = vpack.c.bf16 %v832, %v831
  %v892 = vpack.c.bf16 %v834, %v833
  %v893 = vpack.c.bf16 %v836, %v835
  %v894 = vpack.c.bf16 %v838, %v837
  %v895 = vpack.c.bf16 %v840, %v839
  %v896 = vpack.c.bf16 %v842, %v841
  %v897 = vpack.c.bf16 %v844, %v843
  %v898 = vpack.c.bf16 %v846, %v845
  %v899 = vpack.c.bf16 %v848, %v847
  %v900 = vpack.c.bf16 %v850, %v849
  %v901 = vpack.c.bf16 %v852, %v851
  %v902 = vpack.c.bf16 %v854, %v853
  %v903 = vpack.c.bf16 %v856, %v855
  %v904 = vpack.c.bf16 %v858, %v857
  %v905 = vpack.c.bf16 %v860, %v859
  %v906 = vpack.c.bf16 %v862, %v861
  %v907 = vpack.c.bf16 %v864, %v863
  %v908 = vpack.c.bf16 %v866, %v865
  %v909 = vpack.c.bf16 %v868, %v867
  %v910 = vpack.c.bf16 %v870, %v869
  %v911 = vpack.c.bf16 %v872, %v871
  %v912 = vpack.c.bf16 %v874, %v873
  %v913 = vpack.c.bf16 %v876, %v875
  %v914 = vpack.c.bf16 %v878, %v877
  %v915 = vpack.c.bf16 %v880, %v879
  %v916 = vpack.c.bf16 %v882, %v881
  %v917 = vpack.c.bf16 %v884, %v883
  %v918 = vpack.c.bf16 %v886, %v885
  %v951 = vunpack.c.l.b16 %v887
  %v952 = vunpack.c.h.b16 %v887
  %v953 = vunpack.c.l.b16 %v888
  %v954 = vunpack.c.h.b16 %v888
  %v955 = vunpack.c.l.b16 %v889
  %v956 = vunpack.c.h.b16 %v889
  %v957 = vunpack.c.l.b16 %v890
  %v958 = vunpack.c.h.b16 %v890
  %v959 = vunpack.c.l.b16 %v891
  %v960 = vunpack.c.h.b16 %v891
  %v961 = vunpack.c.l.b16 %v892
  %v962 = vunpack.c.h.b16 %v892
  %v963 = vunpack.c.l.b16 %v893
  %v964 = vunpack.c.h.b16 %v893
  %v965 = vunpack.c.l.b16 %v894
  %v966 = vunpack.c.h.b16 %v894
  %v967 = vunpack.c.l.b16 %v895
  %v968 = vunpack.c.h.b16 %v895
  %v969 = vunpack.c.l.b16 %v896
  %v970 = vunpack.c.h.b16 %v896
  %v971 = vunpack.c.l.b16 %v897
  %v972 = vunpack.c.h.b16 %v897
  %v973 = vunpack.c.l.b16 %v898
  %v974 = vunpack.c.h.b16 %v898
  %v975 = vunpack.c.l.b16 %v899
  %v976 = vunpack.c.h.b16 %v899
  %v977 = vunpack.c.l.b16 %v900
  %v978 = vunpack.c.h.b16 %v900
  %v979 = vunpack.c.l.b16 %v901
  %v980 = vunpack.c.h.b16 %v901
  %v981 = vunpack.c.l.b16 %v902
  %v982 = vunpack.c.h.b16 %v902
  %v983 = vunpack.c.l.b16 %v903
  %v984 = vunpack.c.h.b16 %v903
  %v985 = vunpack.c.l.b16 %v904
  %v986 = vunpack.c.h.b16 %v904
  %v987 = vunpack.c.l.b16 %v905
  %v988 = vunpack.c.h.b16 %v905
  %v989 = vunpack.c.l.b16 %v906
  %v990 = vunpack.c.h.b16 %v906
  %v991 = vunpack.c.l.b16 %v907
  %v992 = vunpack.c.h.b16 %v907
  %v993 = vunpack.c.l.b16 %v908
  %v994 = vunpack.c.h.b16 %v908
  %v995 = vunpack.c.l.b16 %v909
  %v996 = vunpack.c.h.b16 %v909
  %v997 = vunpack.c.l.b16 %v910
  %v998 = vunpack.c.h.b16 %v910
  %v999 = vunpack.c.l.b16 %v911
  %v1000 = vunpack.c.h.b16 %v911
  %v1001 = vunpack.c.l.b16 %v912
  %v1002 = vunpack.c.h.b16 %v912
  %v1003 = vunpack.c.l.b16 %v913
  %v1004 = vunpack.c.h.b16 %v913
  %v1005 = vunpack.c.l.b16 %v914
  %v1006 = vunpack.c.h.b16 %v914
  %v1007 = vunpack.c.l.b16 %v915
  %v1008 = vunpack.c.h.b16 %v915
  %v1009 = vunpack.c.l.b16 %v916
  %v1010 = vunpack.c.h.b16 %v916
  %v1011 = vunpack.c.l.b16 %v917
  %v1012 = vunpack.c.h.b16 %v917
  %v1013 = vunpack.c.l.b16 %v918
  %v1014 = vunpack.c.h.b16 %v918
  %v1015 = vpack.c.b16 %v951, %v951
  %v1016 = vpack.c.b16 %v952, %v952
  %v1017 = vpack.c.b16 %v953, %v953
  %v1018 = vpack.c.b16 %v954, %v954
  %v1019 = vpack.c.b16 %v955, %v955
  %v1020 = vpack.c.b16 %v956, %v956
  %v1021 = vpack.c.b16 %v957, %v957
  %v1022 = vpack.c.b16 %v958, %v958
  %v1023 = vpack.c.b16 %v959, %v959
  %v1024 = vpack.c.b16 %v960, %v960
  %v1025 = vpack.c.b16 %v961, %v961
  %v1026 = vpack.c.b16 %v962, %v962
  %v1027 = vpack.c.b16 %v963, %v963
  %v1028 = vpack.c.b16 %v964, %v964
  %v1029 = vpack.c.b16 %v965, %v965
  %v1030 = vpack.c.b16 %v966, %v966
  %v1031 = vpack.c.b16 %v967, %v967
  %v1032 = vpack.c.b16 %v968, %v968
  %v1033 = vpack.c.b16 %v969, %v969
  %v1034 = vpack.c.b16 %v970, %v970
  %v1035 = vpack.c.b16 %v971, %v971
  %v1036 = vpack.c.b16 %v972, %v972
  %v1037 = vpack.c.b16 %v973, %v973
  %v1038 = vpack.c.b16 %v974, %v974
  %v1039 = vpack.c.b16 %v975, %v975
  %v1040 = vpack.c.b16 %v976, %v976
  %v1041 = vpack.c.b16 %v977, %v977
  %v1042 = vpack.c.b16 %v978, %v978
  %v1043 = vpack.c.b16 %v979, %v979
  %v1044 = vpack.c.b16 %v980, %v980
  %v1045 = vpack.c.b16 %v981, %v981
  %v1046 = vpack.c.b16 %v982, %v982
  %v1047 = vpack.c.b16 %v983, %v983
  %v1048 = vpack.c.b16 %v984, %v984
  %v1049 = vpack.c.b16 %v985, %v985
  %v1050 = vpack.c.b16 %v986, %v986
  %v1051 = vpack.c.b16 %v987, %v987
  %v1052 = vpack.c.b16 %v988, %v988
  %v1053 = vpack.c.b16 %v989, %v989
  %v1054 = vpack.c.b16 %v990, %v990
  %v1055 = vpack.c.b16 %v991, %v991
  %v1056 = vpack.c.b16 %v992, %v992
  %v1057 = vpack.c.b16 %v993, %v993
  %v1058 = vpack.c.b16 %v994, %v994
  %v1059 = vpack.c.b16 %v995, %v995
  %v1060 = vpack.c.b16 %v996, %v996
  %v1061 = vpack.c.b16 %v997, %v997
  %v1062 = vpack.c.b16 %v998, %v998
  %v1063 = vpack.c.b16 %v999, %v999
  %v1064 = vpack.c.b16 %v1000, %v1000
  %v1065 = vpack.c.b16 %v1001, %v1001
  %v1066 = vpack.c.b16 %v1002, %v1002
  %v1067 = vpack.c.b16 %v1003, %v1003
  %v1068 = vpack.c.b16 %v1004, %v1004
  %v1069 = vpack.c.b16 %v1005, %v1005
  %v1070 = vpack.c.b16 %v1006, %v1006
  %v1071 = vpack.c.b16 %v1007, %v1007
  %v1072 = vpack.c.b16 %v1008, %v1008
  %v1073 = vpack.c.b16 %v1009, %v1009
  %v1074 = vpack.c.b16 %v1010, %v1010
  %v1075 = vpack.c.b16 %v1011, %v1011
  %v1076 = vpack.c.b16 %v1012, %v1012
  %v1077 = vpack.c.b16 %v1013, %v1013
  %v1078 = vpack.c.b16 %v1014, %v1014
  %vm1143 = vcmask 27648
  %1144 = vst.msk [vmem:[%s3] sm:$0xf] %vm1143, %v1015
  %1145 = vst.msk [vmem:[%s3 + $0x4] sm:$0xf] %vm1143, %v1016
  %1146 = vst.msk [vmem:[%s3 + $0x8] sm:$0xf] %vm1143, %v1017
  %1147 = vst.msk [vmem:[%s3 + $0xc] sm:$0xf] %vm1143, %v1018
  %1148 = vst.msk [vmem:[%s3 + $0x10] sm:$0xf] %vm1143, %v1019
  %1149 = vst.msk [vmem:[%s3 + $0x14] sm:$0xf] %vm1143, %v1020
  %1150 = vst.msk [vmem:[%s3 + $0x18] sm:$0xf] %vm1143, %v1021
  %1151 = vst.msk [vmem:[%s3 + $0x1c] sm:$0xf] %vm1143, %v1022
  %1152 = vst.msk [vmem:[%s3 + $0x20] sm:$0xf] %vm1143, %v1023
  %1153 = vst.msk [vmem:[%s3 + $0x24] sm:$0xf] %vm1143, %v1024
  %1154 = vst.msk [vmem:[%s3 + $0x28] sm:$0xf] %vm1143, %v1025
  %1155 = vst.msk [vmem:[%s3 + $0x2c] sm:$0xf] %vm1143, %v1026
  %1156 = vst.msk [vmem:[%s3 + $0x30] sm:$0xf] %vm1143, %v1027
  %1157 = vst.msk [vmem:[%s3 + $0x34] sm:$0xf] %vm1143, %v1028
  %1158 = vst.msk [vmem:[%s3 + $0x38] sm:$0xf] %vm1143, %v1029
  %1159 = vst.msk [vmem:[%s3 + $0x3c] sm:$0xf] %vm1143, %v1030
  %1160 = vst.msk [vmem:[%s3 + $0x40] sm:$0xf] %vm1143, %v1031
  %1161 = vst.msk [vmem:[%s3 + $0x44] sm:$0xf] %vm1143, %v1032
  %1162 = vst.msk [vmem:[%s3 + $0x48] sm:$0xf] %vm1143, %v1033
  %1163 = vst.msk [vmem:[%s3 + $0x4c] sm:$0xf] %vm1143, %v1034
  %1164 = vst.msk [vmem:[%s3 + $0x50] sm:$0xf] %vm1143, %v1035
  %1165 = vst.msk [vmem:[%s3 + $0x54] sm:$0xf] %vm1143, %v1036
  %1166 = vst.msk [vmem:[%s3 + $0x58] sm:$0xf] %vm1143, %v1037
  %1167 = vst.msk [vmem:[%s3 + $0x5c] sm:$0xf] %vm1143, %v1038
  %1168 = vst.msk [vmem:[%s3 + $0x60] sm:$0xf] %vm1143, %v1039
  %1169 = vst.msk [vmem:[%s3 + $0x64] sm:$0xf] %vm1143, %v1040
  %1170 = vst.msk [vmem:[%s3 + $0x68] sm:$0xf] %vm1143, %v1041
  %1171 = vst.msk [vmem:[%s3 + $0x6c] sm:$0xf] %vm1143, %v1042
  %1172 = vst.msk [vmem:[%s3 + $0x70] sm:$0xf] %vm1143, %v1043
  %1173 = vst.msk [vmem:[%s3 + $0x74] sm:$0xf] %vm1143, %v1044
  %1174 = vst.msk [vmem:[%s3 + $0x78] sm:$0xf] %vm1143, %v1045
  %1175 = vst.msk [vmem:[%s3 + $0x7c] sm:$0xf] %vm1143, %v1046
  %1176 = vst.msk [vmem:[%s3 + $0x80] sm:$0xf] %vm1143, %v1047
  %1177 = vst.msk [vmem:[%s3 + $0x84] sm:$0xf] %vm1143, %v1048
  %1178 = vst.msk [vmem:[%s3 + $0x88] sm:$0xf] %vm1143, %v1049
  %1179 = vst.msk [vmem:[%s3 + $0x8c] sm:$0xf] %vm1143, %v1050
  %1180 = vst.msk [vmem:[%s3 + $0x90] sm:$0xf] %vm1143, %v1051
  %1181 = vst.msk [vmem:[%s3 + $0x94] sm:$0xf] %vm1143, %v1052
  %1182 = vst.msk [vmem:[%s3 + $0x98] sm:$0xf] %vm1143, %v1053
  %1183 = vst.msk [vmem:[%s3 + $0x9c] sm:$0xf] %vm1143, %v1054
  %1184 = vst.msk [vmem:[%s3 + $0xa0] sm:$0xf] %vm1143, %v1055
  %1185 = vst.msk [vmem:[%s3 + $0xa4] sm:$0xf] %vm1143, %v1056
  %1186 = vst.msk [vmem:[%s3 + $0xa8] sm:$0xf] %vm1143, %v1057
  %1187 = vst.msk [vmem:[%s3 + $0xac] sm:$0xf] %vm1143, %v1058
  %1188 = vst.msk [vmem:[%s3 + $0xb0] sm:$0xf] %vm1143, %v1059
  %1189 = vst.msk [vmem:[%s3 + $0xb4] sm:$0xf] %vm1143, %v1060
  %1190 = vst.msk [vmem:[%s3 + $0xb8] sm:$0xf] %vm1143, %v1061
  %1191 = vst.msk [vmem:[%s3 + $0xbc] sm:$0xf] %vm1143, %v1062
  %1192 = vst.msk [vmem:[%s3 + $0xc0] sm:$0xf] %vm1143, %v1063
  %1193 = vst.msk [vmem:[%s3 + $0xc4] sm:$0xf] %vm1143, %v1064
  %1194 = vst.msk [vmem:[%s3 + $0xc8] sm:$0xf] %vm1143, %v1065
  %1195 = vst.msk [vmem:[%s3 + $0xcc] sm:$0xf] %vm1143, %v1066
  %1196 = vst.msk [vmem:[%s3 + $0xd0] sm:$0xf] %vm1143, %v1067
  %1197 = vst.msk [vmem:[%s3 + $0xd4] sm:$0xf] %vm1143, %v1068
  %1198 = vst.msk [vmem:[%s3 + $0xd8] sm:$0xf] %vm1143, %v1069
  %1199 = vst.msk [vmem:[%s3 + $0xdc] sm:$0xf] %vm1143, %v1070
  %1200 = vst.msk [vmem:[%s3 + $0xe0] sm:$0xf] %vm1143, %v1071
  %1201 = vst.msk [vmem:[%s3 + $0xe4] sm:$0xf] %vm1143, %v1072
  %1202 = vst.msk [vmem:[%s3 + $0xe8] sm:$0xf] %vm1143, %v1073
  %1203 = vst.msk [vmem:[%s3 + $0xec] sm:$0xf] %vm1143, %v1074
  %1204 = vst.msk [vmem:[%s3 + $0xf0] sm:$0xf] %vm1143, %v1075
  %1205 = vst.msk [vmem:[%s3 + $0xf4] sm:$0xf] %vm1143, %v1076
  %1206 = vst.msk [vmem:[%s3 + $0xf8] sm:$0xf] %vm1143, %v1077
  %1207 = vst.msk [vmem:[%s3 + $0xfc] sm:$0xf] %vm1143, %v1078
  // Predicated region
  $region14: #{_epilogue_forward.2} parent=0 // pred_check
    _
  $region15: #{_epilogue_forward.2} parent=0 // pred_check_branch
    %1209 = sbr.rel (0) target = $region17
  $region16: #{_epilogue_forward.2} parent=0 // pred_region
    _
  $region17: #{_epilogue_forward.2} parent=0 // pred_fallthru
    _
  // Predicated region
  $region18: #{_epilogue_forward.2} parent=0 // pred_check
    _
  $region19: #{_epilogue_forward.2} parent=0 // pred_check_branch
    %1211 = sbr.rel (0) target = $region21
  $region20: #{_epilogue_forward.2} parent=0 // pred_region
    _
  $region21: #{_epilogue_forward.2} parent=0 // pred_fallthru
    _

// kernel: _epilogue_forward.3
$region0: #{_epilogue_forward.3}
  #allocation0 [shape = 'u32[]', space=smem, size = 0x4, offset = 0x4, fixed_abs, tag = 'smem constant byte address 0x4 - core index']
  #allocation1 [shape = 'u32[144,128]{1,0:T(1,128)}', space=vmem, size = 0x12000, scoped, tag = 'internal scratch']
  #allocation2 [shape = 'f32[2,4]{1,0:T(2,128)}', space=vmem, size = 0x400, scoped, tag = 'scratch operand']
  %s0 = inlined_call_operand.vmem [shape: bf16[2,1024], index: 0, kind: input, shape index: {}]
  %s1 = inlined_call_operand.vmem [shape: bf16[1024,4], index: 1, kind: input, shape index: {}]
  %s2 = inlined_call_operand.vmem [shape: f32[1,4], index: 2, kind: input, shape index: {}]
  %s3 = inlined_call_operand.vmem [shape: bf16[4,8], index: 3, kind: input, shape index: {}]
  %s4 = inlined_call_operand.vmem [shape: f32[1,8], index: 4, kind: input, shape index: {}]
  %s5 = inlined_call_operand.vmem [shape: f32[2,8], index: 5, kind: input, shape index: {}]
  %s6 = inlined_call_operand.vmem [shape: f32[2,1], index: 6, kind: output, shape index: {}]
  %s7 = sld [smem:[#allocation0]]
  $region42: #{_epilogue_forward.3} parent=0
    _
  %s9 = ssub.s32 1, %s7
  %s10 = scalar_select 0, %s9, %s7
  // Predicated region
  $region2: #{_epilogue_forward.3} parent=0 // pred_check
    _
  $region3: #{_epilogue_forward.3} parent=0 // pred_check_branch
    %12 = sbr.rel (0) target = $region5
  $region4: #{_epilogue_forward.3} parent=0 // pred_region
    _
  $region5: #{_epilogue_forward.3} parent=0 // pred_fallthru
    _
  // Predicated region
  $region6: #{_epilogue_forward.3} parent=0 // pred_check
    _
  $region7: #{_epilogue_forward.3} parent=0 // pred_check_branch
    %14 = sbr.rel (0) target = $region9
  $region8: #{_epilogue_forward.3} parent=0 // pred_region
    _
  $region9: #{_epilogue_forward.3} parent=0 // pred_fallthru
    _
  // Predicated region
  $region10: #{_epilogue_forward.3} parent=0 // pred_check
    _
  $region11: #{_epilogue_forward.3} parent=0 // pred_check_branch
    %16 = sbr.rel (0) target = $region13
  $region12: #{_epilogue_forward.3} parent=0 // pred_region
    _
  $region13: #{_epilogue_forward.3} parent=0 // pred_fallthru
    _
  // Predicated region
  $region14: #{_epilogue_forward.3} parent=0 // pred_check
    _
  $region15: #{_epilogue_forward.3} parent=0 // pred_check_branch
    %18 = sbr.rel (0) target = $region17
  $region16: #{_epilogue_forward.3} parent=0 // pred_region
    _
  $region17: #{_epilogue_forward.3} parent=0 // pred_fallthru
    _
  // Predicated region
  $region18: #{_epilogue_forward.3} parent=0 // pred_check
    _
  $region19: #{_epilogue_forward.3} parent=0 // pred_check_branch
    %20 = sbr.rel (0) target = $region21
  $region20: #{_epilogue_forward.3} parent=0 // pred_region
    _
  $region21: #{_epilogue_forward.3} parent=0 // pred_fallthru
    _
  // Predicated region
  $region22: #{_epilogue_forward.3} parent=0 // pred_check
    _
  $region23: #{_epilogue_forward.3} parent=0 // pred_check_branch
    %22 = sbr.rel (0) target = $region25
  $region24: #{_epilogue_forward.3} parent=0 // pred_region
    _
  $region25: #{_epilogue_forward.3} parent=0 // pred_fallthru
    _
  %p24 = scmp.eq.s32.totalorder 0, 0
  // Predicated region
  $region26: #{_epilogue_forward.3} parent=0 // pred_check
    %p25 = pneg %p24
  $region27: #{_epilogue_forward.3} parent=0 // pred_check_branch
    %27 = sbr.rel (%p25) target = $region29
  $region28: #{_epilogue_forward.3} parent=0 // pred_region
    %vm28 = vcmask 25600
    %29 = vst.msk [vmem:[#allocation2] sm:$0x3] %vm28, 0.0
  $region29: #{_epilogue_forward.3} parent=0 // pred_fallthru
    _
  %v30 = vld [vmem:[#allocation2] sm:$0x3]
  %v31 = vld [vmem:[%s0] sm:$0xff]
  %v32 = vld [vmem:[%s1] sm:$0xf]
  %v33 = vld [vmem:[%s1 + $0x4] sm:$0xf]
  %v34 = vld [vmem:[%s1 + $0x8] sm:$0xf]
  %v35 = vld [vmem:[%s1 + $0xc] sm:$0xf]
  %v36 = vld [vmem:[%s1 + $0x10] sm:$0xf]
  %v37 = vld [vmem:[%s1 + $0x14] sm:$0xf]
  %v38 = vld [vmem:[%s1 + $0x18] sm:$0xf]
  %v39 = vld [vmem:[%s1 + $0x1c] sm:$0xf]
  %v40 = vld [vmem:[%s1 + $0x20] sm:$0xf]
  %v41 = vld [vmem:[%s1 + $0x24] sm:$0xf]
  %v42 = vld [vmem:[%s1 + $0x28] sm:$0xf]
  %v43 = vld [vmem:[%s1 + $0x2c] sm:$0xf]
  %v44 = vld [vmem:[%s1 + $0x30] sm:$0xf]
  %v45 = vld [vmem:[%s1 + $0x34] sm:$0xf]
  %v46 = vld [vmem:[%s1 + $0x38] sm:$0xf]
  %v47 = vld [vmem:[%s1 + $0x3c] sm:$0xf]
  %v48 = vld [vmem:[%s1 + $0x40] sm:$0xf]
  %v49 = vld [vmem:[%s1 + $0x44] sm:$0xf]
  %v50 = vld [vmem:[%s1 + $0x48] sm:$0xf]
  %v51 = vld [vmem:[%s1 + $0x4c] sm:$0xf]
  %v52 = vld [vmem:[%s1 + $0x50] sm:$0xf]
  %v53 = vld [vmem:[%s1 + $0x54] sm:$0xf]
  %v54 = vld [vmem:[%s1 + $0x58] sm:$0xf]
  %v55 = vld [vmem:[%s1 + $0x5c] sm:$0xf]
  %v56 = vld [vmem:[%s1 + $0x60] sm:$0xf]
  %v57 = vld [vmem:[%s1 + $0x64] sm:$0xf]
  %v58 = vld [vmem:[%s1 + $0x68] sm:$0xf]
  %v59 = vld [vmem:[%s1 + $0x6c] sm:$0xf]
  %v60 = vld [vmem:[%s1 + $0x70] sm:$0xf]
  %v61 = vld [vmem:[%s1 + $0x74] sm:$0xf]
  %v62 = vld [vmem:[%s1 + $0x78] sm:$0xf]
  %v63 = vld [vmem:[%s1 + $0x7c] sm:$0xf]
  %v64 = vld [vmem:[%s1 + $0x80] sm:$0xf]
  %v65 = vld [vmem:[%s1 + $0x84] sm:$0xf]
  %v66 = vld [vmem:[%s1 + $0x88] sm:$0xf]
  %v67 = vld [vmem:[%s1 + $0x8c] sm:$0xf]
  %v68 = vld [vmem:[%s1 + $0x90] sm:$0xf]
  %v69 = vld [vmem:[%s1 + $0x94] sm:$0xf]
  %v70 = vld [vmem:[%s1 + $0x98] sm:$0xf]
  %v71 = vld [vmem:[%s1 + $0x9c] sm:$0xf]
  %v72 = vld [vmem:[%s1 + $0xa0] sm:$0xf]
  %v73 = vld [vmem:[%s1 + $0xa4] sm:$0xf]
  %v74 = vld [vmem:[%s1 + $0xa8] sm:$0xf]
  %v75 = vld [vmem:[%s1 + $0xac] sm:$0xf]
  %v76 = vld [vmem:[%s1 + $0xb0] sm:$0xf]
  %v77 = vld [vmem:[%s1 + $0xb4] sm:$0xf]
  %v78 = vld [vmem:[%s1 + $0xb8] sm:$0xf]
  %v79 = vld [vmem:[%s1 + $0xbc] sm:$0xf]
  %v80 = vld [vmem:[%s1 + $0xc0] sm:$0xf]
  %v81 = vld [vmem:[%s1 + $0xc4] sm:$0xf]
  %v82 = vld [vmem:[%s1 + $0xc8] sm:$0xf]
  %v83 = vld [vmem:[%s1 + $0xcc] sm:$0xf]
  %v84 = vld [vmem:[%s1 + $0xd0] sm:$0xf]
  %v85 = vld [vmem:[%s1 + $0xd4] sm:$0xf]
  %v86 = vld [vmem:[%s1 + $0xd8] sm:$0xf]
  %v87 = vld [vmem:[%s1 + $0xdc] sm:$0xf]
  %v88 = vld [vmem:[%s1 + $0xe0] sm:$0xf]
  %v89 = vld [vmem:[%s1 + $0xe4] sm:$0xf]
  %v90 = vld [vmem:[%s1 + $0xe8] sm:$0xf]
  %v91 = vld [vmem:[%s1 + $0xec] sm:$0xf]
  %v92 = vld [vmem:[%s1 + $0xf0] sm:$0xf]
  %v93 = vld [vmem:[%s1 + $0xf4] sm:$0xf]
  %v94 = vld [vmem:[%s1 + $0xf8] sm:$0xf]
  %v95 = vld [vmem:[%s1 + $0xfc] sm:$0xf]
  %v96 = vld [vmem:[%s1 + $0x100] sm:$0xf]
  %v97 = vld [vmem:[%s1 + $0x104] sm:$0xf]
  %v98 = vld [vmem:[%s1 + $0x108] sm:$0xf]
  %v99 = vld [vmem:[%s1 + $0x10c] sm:$0xf]
  %v100 = vld [vmem:[%s1 + $0x110] sm:$0xf]
  %v101 = vld [vmem:[%s1 + $0x114] sm:$0xf]
  %v102 = vld [vmem:[%s1 + $0x118] sm:$0xf]
  %v103 = vld [vmem:[%s1 + $0x11c] sm:$0xf]
  %v104 = vld [vmem:[%s1 + $0x120] sm:$0xf]
  %v105 = vld [vmem:[%s1 + $0x124] sm:$0xf]
  %v106 = vld [vmem:[%s1 + $0x128] sm:$0xf]
  %v107 = vld [vmem:[%s1 + $0x12c] sm:$0xf]
  %v108 = vld [vmem:[%s1 + $0x130] sm:$0xf]
  %v109 = vld [vmem:[%s1 + $0x134] sm:$0xf]
  %v110 = vld [vmem:[%s1 + $0x138] sm:$0xf]
  %v111 = vld [vmem:[%s1 + $0x13c] sm:$0xf]
  %v112 = vld [vmem:[%s1 + $0x140] sm:$0xf]
  %v113 = vld [vmem:[%s1 + $0x144] sm:$0xf]
  %v114 = vld [vmem:[%s1 + $0x148] sm:$0xf]
  %v115 = vld [vmem:[%s1 + $0x14c] sm:$0xf]
  %v116 = vld [vmem:[%s1 + $0x150] sm:$0xf]
  %v117 = vld [vmem:[%s1 + $0x154] sm:$0xf]
  %v118 = vld [vmem:[%s1 + $0x158] sm:$0xf]
  %v119 = vld [vmem:[%s1 + $0x15c] sm:$0xf]
  %v120 = vld [vmem:[%s1 + $0x160] sm:$0xf]
  %v121 = vld [vmem:[%s1 + $0x164] sm:$0xf]
  %v122 = vld [vmem:[%s1 + $0x168] sm:$0xf]
  %v123 = vld [vmem:[%s1 + $0x16c] sm:$0xf]
  %v124 = vld [vmem:[%s1 + $0x170] sm:$0xf]
  %v125 = vld [vmem:[%s1 + $0x174] sm:$0xf]
  %v126 = vld [vmem:[%s1 + $0x178] sm:$0xf]
  %v127 = vld [vmem:[%s1 + $0x17c] sm:$0xf]
  %v128 = vld [vmem:[%s1 + $0x180] sm:$0xf]
  %v129 = vld [vmem:[%s1 + $0x184] sm:$0xf]
  %v130 = vld [vmem:[%s1 + $0x188] sm:$0xf]
  %v131 = vld [vmem:[%s1 + $0x18c] sm:$0xf]
  %v132 = vld [vmem:[%s1 + $0x190] sm:$0xf]
  %v133 = vld [vmem:[%s1 + $0x194] sm:$0xf]
  %v134 = vld [vmem:[%s1 + $0x198] sm:$0xf]
  %v135 = vld [vmem:[%s1 + $0x19c] sm:$0xf]
  %v136 = vld [vmem:[%s1 + $0x1a0] sm:$0xf]
  %v137 = vld [vmem:[%s1 + $0x1a4] sm:$0xf]
  %v138 = vld [vmem:[%s1 + $0x1a8] sm:$0xf]
  %v139 = vld [vmem:[%s1 + $0x1ac] sm:$0xf]
  %v140 = vld [vmem:[%s1 + $0x1b0] sm:$0xf]
  %v141 = vld [vmem:[%s1 + $0x1b4] sm:$0xf]
  %v142 = vld [vmem:[%s1 + $0x1b8] sm:$0xf]
  %v143 = vld [vmem:[%s1 + $0x1bc] sm:$0xf]
  %v144 = vld [vmem:[%s1 + $0x1c0] sm:$0xf]
  %v145 = vld [vmem:[%s1 + $0x1c4] sm:$0xf]
  %v146 = vld [vmem:[%s1 + $0x1c8] sm:$0xf]
  %v147 = vld [vmem:[%s1 + $0x1cc] sm:$0xf]
  %v148 = vld [vmem:[%s1 + $0x1d0] sm:$0xf]
  %v149 = vld [vmem:[%s1 + $0x1d4] sm:$0xf]
  %v150 = vld [vmem:[%s1 + $0x1d8] sm:$0xf]
  %v151 = vld [vmem:[%s1 + $0x1dc] sm:$0xf]
  %v152 = vld [vmem:[%s1 + $0x1e0] sm:$0xf]
  %v153 = vld [vmem:[%s1 + $0x1e4] sm:$0xf]
  %v154 = vld [vmem:[%s1 + $0x1e8] sm:$0xf]
  %v155 = vld [vmem:[%s1 + $0x1ec] sm:$0xf]
  %v156 = vld [vmem:[%s1 + $0x1f0] sm:$0xf]
  %v157 = vld [vmem:[%s1 + $0x1f4] sm:$0xf]
  %v158 = vld [vmem:[%s1 + $0x1f8] sm:$0xf]
  %v159 = vld [vmem:[%s1 + $0x1fc] sm:$0xf]
  %v161 = vcombine.high %v31, %v31
  %v163 = vunpack.c.l.s4 1966171168
  %v164 = vunpack.c.0.s8 %v163
  %v165 = vlaneseq
  %v166 = vshrl.u32 %v165, 7
  %v167 = vsub.s32 %v164, %v166
  %v168 = vrot.slane %v31, %v167
  %v170 = vunpack.c.l.s4 1966171168
  %v171 = vunpack.c.0.s8 %v170
  %v172 = vlaneseq
  %v173 = vshrl.u32 %v172, 7
  %v174 = vsub.s32 %v171, %v173
  %v175 = vrot.slane %v161, %v174
  %v176 = vcombine.high %v168, %v168
  %v177 = vcombine.high %v175, %v175
  %v179 = vunpack.c.l.s4 1966171168
  %v180 = vunpack.c.0.s8 %v179
  %v181 = vlaneseq
  %v182 = vshrl.u32 %v181, 7
  %v183 = vsub.s32 %v180, %v182
  %v184 = vrot.slane %v168, %v183
  %v186 = vunpack.c.l.s4 1966171168
  %v187 = vunpack.c.0.s8 %v186
  %v188 = vlaneseq
  %v189 = vshrl.u32 %v188, 7
  %v190 = vsub.s32 %v187, %v189
  %v191 = vrot.slane %v175, %v190
  %v193 = vunpack.c.l.s4 1966171168
  %v194 = vunpack.c.0.s8 %v193
  %v195 = vlaneseq
  %v196 = vshrl.u32 %v195, 7
  %v197 = vsub.s32 %v194, %v196
  %v198 = vrot.slane %v176, %v197
  %v200 = vunpack.c.l.s4 1966171168
  %v201 = vunpack.c.0.s8 %v200
  %v202 = vlaneseq
  %v203 = vshrl.u32 %v202, 7
  %v204 = vsub.s32 %v201, %v203
  %v205 = vrot.slane %v177, %v204
  %v206 = vcombine.high %v184, %v184
  %v207 = vcombine.high %v191, %v191
  %v208 = vcombine.high %v198, %v198
  %v209 = vcombine.high %v205, %v205
  %v346 = vunpack.c.l.b16 %v32
  %v347 = vunpack.c.l.b16 %v33
  %v348 = vunpack.c.l.b16 %v34
  %v349 = vunpack.c.l.b16 %v35
  %v350 = vunpack.c.l.b16 %v36
  %v351 = vunpack.c.l.b16 %v37
  %v352 = vunpack.c.l.b16 %v38
  %v353 = vunpack.c.l.b16 %v39
  %v354 = vunpack.c.l.b16 %v40
  %v355 = vunpack.c.l.b16 %v41
  %v356 = vunpack.c.l.b16 %v42
  %v357 = vunpack.c.l.b16 %v43
  %v358 = vunpack.c.l.b16 %v44
  %v359 = vunpack.c.l.b16 %v45
  %v360 = vunpack.c.l.b16 %v46
  %v361 = vunpack.c.l.b16 %v47
  %v362 = vunpack.c.l.b16 %v48
  %v363 = vunpack.c.l.b16 %v49
  %v364 = vunpack.c.l.b16 %v50
  %v365 = vunpack.c.l.b16 %v51
  %v366 = vunpack.c.l.b16 %v52
  %v367 = vunpack.c.l.b16 %v53
  %v368 = vunpack.c.l.b16 %v54
  %v369 = vunpack.c.l.b16 %v55
  %v370 = vunpack.c.l.b16 %v56
  %v371 = vunpack.c.l.b16 %v57
  %v372 = vunpack.c.l.b16 %v58
  %v373 = vunpack.c.l.b16 %v59
  %v374 = vunpack.c.l.b16 %v60
  %v375 = vunpack.c.l.b16 %v61
  %v376 = vunpack.c.l.b16 %v62
  %v377 = vunpack.c.l.b16 %v63
  %v378 = vunpack.c.l.b16 %v64
  %v379 = vunpack.c.l.b16 %v65
  %v380 = vunpack.c.l.b16 %v66
  %v381 = vunpack.c.l.b16 %v67
  %v382 = vunpack.c.l.b16 %v68
  %v383 = vunpack.c.l.b16 %v69
  %v384 = vunpack.c.l.b16 %v70
  %v385 = vunpack.c.l.b16 %v71
  %v386 = vunpack.c.l.b16 %v72
  %v387 = vunpack.c.l.b16 %v73
  %v388 = vunpack.c.l.b16 %v74
  %v389 = vunpack.c.l.b16 %v75
  %v390 = vunpack.c.l.b16 %v76
  %v391 = vunpack.c.l.b16 %v77
  %v392 = vunpack.c.l.b16 %v78
  %v393 = vunpack.c.l.b16 %v79
  %v394 = vunpack.c.l.b16 %v80
  %v395 = vunpack.c.l.b16 %v81
  %v396 = vunpack.c.l.b16 %v82
  %v397 = vunpack.c.l.b16 %v83
  %v398 = vunpack.c.l.b16 %v84
  %v399 = vunpack.c.l.b16 %v85
  %v400 = vunpack.c.l.b16 %v86
  %v401 = vunpack.c.l.b16 %v87
  %v402 = vunpack.c.l.b16 %v88
  %v403 = vunpack.c.l.b16 %v89
  %v404 = vunpack.c.l.b16 %v90
  %v405 = vunpack.c.l.b16 %v91
  %v406 = vunpack.c.l.b16 %v92
  %v407 = vunpack.c.l.b16 %v93
  %v408 = vunpack.c.l.b16 %v94
  %v409 = vunpack.c.l.b16 %v95
  %v410 = vunpack.c.l.b16 %v96
  %v411 = vunpack.c.l.b16 %v97
  %v412 = vunpack.c.l.b16 %v98
  %v413 = vunpack.c.l.b16 %v99
  %v414 = vunpack.c.l.b16 %v100
  %v415 = vunpack.c.l.b16 %v101
  %v416 = vunpack.c.l.b16 %v102
  %v417 = vunpack.c.l.b16 %v103
  %v418 = vunpack.c.l.b16 %v104
  %v419 = vunpack.c.l.b16 %v105
  %v420 = vunpack.c.l.b16 %v106
  %v421 = vunpack.c.l.b16 %v107
  %v422 = vunpack.c.l.b16 %v108
  %v423 = vunpack.c.l.b16 %v109
  %v424 = vunpack.c.l.b16 %v110
  %v425 = vunpack.c.l.b16 %v111
  %v426 = vunpack.c.l.b16 %v112
  %v427 = vunpack.c.l.b16 %v113
  %v428 = vunpack.c.l.b16 %v114
  %v429 = vunpack.c.l.b16 %v115
  %v430 = vunpack.c.l.b16 %v116
  %v431 = vunpack.c.l.b16 %v117
  %v432 = vunpack.c.l.b16 %v118
  %v433 = vunpack.c.l.b16 %v119
  %v434 = vunpack.c.l.b16 %v120
  %v435 = vunpack.c.l.b16 %v121
  %v436 = vunpack.c.l.b16 %v122
  %v437 = vunpack.c.l.b16 %v123
  %v438 = vunpack.c.l.b16 %v124
  %v439 = vunpack.c.l.b16 %v125
  %v440 = vunpack.c.l.b16 %v126
  %v441 = vunpack.c.l.b16 %v127
  %v442 = vunpack.c.l.b16 %v128
  %v443 = vunpack.c.l.b16 %v129
  %v444 = vunpack.c.l.b16 %v130
  %v445 = vunpack.c.l.b16 %v131
  %v446 = vunpack.c.l.b16 %v132
  %v447 = vunpack.c.l.b16 %v133
  %v448 = vunpack.c.l.b16 %v134
  %v449 = vunpack.c.l.b16 %v135
  %v450 = vunpack.c.l.b16 %v136
  %v451 = vunpack.c.l.b16 %v137
  %v452 = vunpack.c.l.b16 %v138
  %v453 = vunpack.c.l.b16 %v139
  %v454 = vunpack.c.l.b16 %v140
  %v455 = vunpack.c.l.b16 %v141
  %v456 = vunpack.c.l.b16 %v142
  %v457 = vunpack.c.l.b16 %v143
  %v458 = vunpack.c.l.b16 %v144
  %v459 = vunpack.c.l.b16 %v145
  %v460 = vunpack.c.l.b16 %v146
  %v461 = vunpack.c.l.b16 %v147
  %v462 = vunpack.c.l.b16 %v148
  %v463 = vunpack.c.l.b16 %v149
  %v464 = vunpack.c.l.b16 %v150
  %v465 = vunpack.c.l.b16 %v151
  %v466 = vunpack.c.l.b16 %v152
  %v467 = vunpack.c.l.b16 %v153
  %v468 = vunpack.c.l.b16 %v154
  %v469 = vunpack.c.l.b16 %v155
  %v470 = vunpack.c.l.b16 %v156
  %v471 = vunpack.c.l.b16 %v157
  %v472 = vunpack.c.l.b16 %v158
  %v473 = vunpack.c.l.b16 %v159
  %v474 = vpack.c.b16 %v347, %v346
  %v475 = vpack.c.b16 %v349, %v348
  %v476 = vpack.c.b16 %v351, %v350
  %v477 = vpack.c.b16 %v353, %v352
  %v478 = vpack.c.b16 %v355, %v354
  %v479 = vpack.c.b16 %v357, %v356
  %v480 = vpack.c.b16 %v359, %v358
  %v481 = vpack.c.b16 %v361, %v360
  %v482 = vpack.c.b16 %v363, %v362
  %v483 = vpack.c.b16 %v365, %v364
  %v484 = vpack.c.b16 %v367, %v366
  %v485 = vpack.c.b16 %v369, %v368
  %v486 = vpack.c.b16 %v371, %v370
  %v487 = vpack.c.b16 %v373, %v372
  %v488 = vpack.c.b16 %v375, %v374
  %v489 = vpack.c.b16 %v377, %v376
  %v490 = vpack.c.b16 %v379, %v378
  %v491 = vpack.c.b16 %v381, %v380
  %v492 = vpack.c.b16 %v383, %v382
  %v493 = vpack.c.b16 %v385, %v384
  %v494 = vpack.c.b16 %v387, %v386
  %v495 = vpack.c.b16 %v389, %v388
  %v496 = vpack.c.b16 %v391, %v390
  %v497 = vpack.c.b16 %v393, %v392
  %v498 = vpack.c.b16 %v395, %v394
  %v499 = vpack.c.b16 %v397, %v396
  %v500 = vpack.c.b16 %v399, %v398
  %v501 = vpack.c.b16 %v401, %v400
  %v502 = vpack.c.b16 %v403, %v402
  %v503 = vpack.c.b16 %v405, %v404
  %v504 = vpack.c.b16 %v407, %v406
  %v505 = vpack.c.b16 %v409, %v408
  %v506 = vpack.c.b16 %v411, %v410
  %v507 = vpack.c.b16 %v413, %v412
  %v508 = vpack.c.b16 %v415, %v414
  %v509 = vpack.c.b16 %v417, %v416
  %v510 = vpack.c.b16 %v419, %v418
  %v511 = vpack.c.b16 %v421, %v420
  %v512 = vpack.c.b16 %v423, %v422
  %v513 = vpack.c.b16 %v425, %v424
  %v514 = vpack.c.b16 %v427, %v426
  %v515 = vpack.c.b16 %v429, %v428
  %v516 = vpack.c.b16 %v431, %v430
  %v517 = vpack.c.b16 %v433, %v432
  %v518 = vpack.c.b16 %v435, %v434
  %v519 = vpack.c.b16 %v437, %v436
  %v520 = vpack.c.b16 %v439, %v438
  %v521 = vpack.c.b16 %v441, %v440
  %v522 = vpack.c.b16 %v443, %v442
  %v523 = vpack.c.b16 %v445, %v444
  %v524 = vpack.c.b16 %v447, %v446
  %v525 = vpack.c.b16 %v449, %v448
  %v526 = vpack.c.b16 %v451, %v450
  %v527 = vpack.c.b16 %v453, %v452
  %v528 = vpack.c.b16 %v455, %v454
  %v529 = vpack.c.b16 %v457, %v456
  %v530 = vpack.c.b16 %v459, %v458
  %v531 = vpack.c.b16 %v461, %v460
  %v532 = vpack.c.b16 %v463, %v462
  %v533 = vpack.c.b16 %v465, %v464
  %v534 = vpack.c.b16 %v467, %v466
  %v535 = vpack.c.b16 %v469, %v468
  %v536 = vpack.c.b16 %v471, %v470
  %v537 = vpack.c.b16 %v473, %v472
  %602 = vmatprep.subr.bf16.mxu0 0
  %603 = vmatpush1.bf16.msra.mxu0 %v474
  %604 = vmatprep.subr.bf16.mxu0 0
  %605 = vmatpush1.bf16.msra.mxu0 %v475
  %606 = vmatprep.subr.bf16.mxu0 0
  %607 = vmatpush1.bf16.msra.mxu0 %v476
  %608 = vmatprep.subr.bf16.mxu0 0
  %609 = vmatpush1.bf16.msra.mxu0 %v477
  %610 = vmatprep.subr.bf16.mxu0 0
  %611 = vmatpush1.bf16.msra.mxu0 %v478
  %612 = vmatprep.subr.bf16.mxu0 0
  %613 = vmatpush1.bf16.msra.mxu0 %v479
  %614 = vmatprep.subr.bf16.mxu0 0
  %615 = vmatpush1.bf16.msra.mxu0 %v480
  %616 = vmatprep.subr.bf16.mxu0 0
  %617 = vmatpush1.bf16.msra.mxu0 %v481
  %618 = vmatprep.subr.bf16.mxu0 0
  %619 = vmatpush1.bf16.msra.mxu0 %v482
  %620 = vmatprep.subr.bf16.mxu0 0
  %621 = vmatpush1.bf16.msra.mxu0 %v483
  %622 = vmatprep.subr.bf16.mxu0 0
  %623 = vmatpush1.bf16.msra.mxu0 %v484
  %624 = vmatprep.subr.bf16.mxu0 0
  %625 = vmatpush1.bf16.msra.mxu0 %v485
  %626 = vmatprep.subr.bf16.mxu0 0
  %627 = vmatpush1.bf16.msra.mxu0 %v486
  %628 = vmatprep.subr.bf16.mxu0 0
  %629 = vmatpush1.bf16.msra.mxu0 %v487
  %630 = vmatprep.subr.bf16.mxu0 0
  %631 = vmatpush1.bf16.msra.mxu0 %v488
  %632 = vmatprep.subr.bf16.mxu0 0
  %633 = vmatpush1.bf16.msra.mxu0 %v489
  %634 = vmatprep.mubr.bf16.mxu0 %v198
  %635 = vmatmul.mubr.bf16.gmra.mrb[0].mxu0 %v184
  %v636 = vpop.f32.mrb[0].mxu0
  %v637 = vadd.f32 0.0, %v636
  %v638 = vpop.f32.mrb[0].mxu0
  %v639 = vpop.f32.mrb[0].mxu0
  %v640 = vpop.f32.mrb[0].mxu0
  %641 = vdwg.mxu0
  %642 = vmatprep.subr.bf16.mxu0 0
  %643 = vmatpush1.bf16.msra.mxu0 %v490
  %644 = vmatprep.subr.bf16.mxu0 0
  %645 = vmatpush1.bf16.msra.mxu0 %v491
  %646 = vmatprep.subr.bf16.mxu0 0
  %647 = vmatpush1.bf16.msra.mxu0 %v492
  %648 = vmatprep.subr.bf16.mxu0 0
  %649 = vmatpush1.bf16.msra.mxu0 %v493
  %650 = vmatprep.subr.bf16.mxu0 0
  %651 = vmatpush1.bf16.msra.mxu0 %v494
  %652 = vmatprep.subr.bf16.mxu0 0
  %653 = vmatpush1.bf16.msra.mxu0 %v495
  %654 = vmatprep.subr.bf16.mxu0 0
  %655 = vmatpush1.bf16.msra.mxu0 %v496
  %656 = vmatprep.subr.bf16.mxu0 0
  %657 = vmatpush1.bf16.msra.mxu0 %v497
  %658 = vmatprep.subr.bf16.mxu0 0
  %659 = vmatpush1.bf16.msra.mxu0 %v498
  %660 = vmatprep.subr.bf16.mxu0 0
  %661 = vmatpush1.bf16.msra.mxu0 %v499
  %662 = vmatprep.subr.bf16.mxu0 0
  %663 = vmatpush1.bf16.msra.mxu0 %v500
  %664 = vmatprep.subr.bf16.mxu0 0
  %665 = vmatpush1.bf16.msra.mxu0 %v501
  %666 = vmatprep.subr.bf16.mxu0 0
  %667 = vmatpush1.bf16.msra.mxu0 %v502
  %668 = vmatprep.subr.bf16.mxu0 0
  %669 = vmatpush1.bf16.msra.mxu0 %v503
  %670 = vmatprep.subr.bf16.mxu0 0
  %671 = vmatpush1.bf16.msra.mxu0 %v504
  %672 = vmatprep.subr.bf16.mxu0 0
  %673 = vmatpush1.bf16.msra.mxu0 %v505
  %674 = vmatprep.mubr.bf16.mxu0 %v208
  %675 = vmatmul.mubr.bf16.gmra.mrb[0].mxu0 %v206
  %v676 = vpop.f32.mrb[0].mxu0
  %v677 = vadd.f32 %v637, %v676
  %v678 = vpop.f32.mrb[0].mxu0
  %v679 = vpop.f32.mrb[0].mxu0
  %v680 = vpop.f32.mrb[0].mxu0
  %681 = vdwg.mxu0
  %682 = vmatprep.subr.bf16.mxu0 0
  %683 = vmatpush1.bf16.msra.mxu0 %v506
  %684 = vmatprep.subr.bf16.mxu0 0
  %685 = vmatpush1.bf16.msra.mxu0 %v507
  %686 = vmatprep.subr.bf16.mxu0 0
  %687 = vmatpush1.bf16.msra.mxu0 %v508
  %688 = vmatprep.subr.bf16.mxu0 0
  %689 = vmatpush1.bf16.msra.mxu0 %v509
  %690 = vmatprep.subr.bf16.mxu0 0
  %691 = vmatpush1.bf16.msra.mxu0 %v510
  %692 = vmatprep.subr.bf16.mxu0 0
  %693 = vmatpush1.bf16.msra.mxu0 %v511
  %694 = vmatprep.subr.bf16.mxu0 0
  %695 = vmatpush1.bf16.msra.mxu0 %v512
  %696 = vmatprep.subr.bf16.mxu0 0
  %697 = vmatpush1.bf16.msra.mxu0 %v513
  %698 = vmatprep.subr.bf16.mxu0 0
  %699 = vmatpush1.bf16.msra.mxu0 %v514
  %700 = vmatprep.subr.bf16.mxu0 0
  %701 = vmatpush1.bf16.msra.mxu0 %v515
  %702 = vmatprep.subr.bf16.mxu0 0
  %703 = vmatpush1.bf16.msra.mxu0 %v516
  %704 = vmatprep.subr.bf16.mxu0 0
  %705 = vmatpush1.bf16.msra.mxu0 %v517
  %706 = vmatprep.subr.bf16.mxu0 0
  %707 = vmatpush1.bf16.msra.mxu0 %v518
  %708 = vmatprep.subr.bf16.mxu0 0
  %709 = vmatpush1.bf16.msra.mxu0 %v519
  %710 = vmatprep.subr.bf16.mxu0 0
  %711 = vmatpush1.bf16.msra.mxu0 %v520
  %712 = vmatprep.subr.bf16.mxu0 0
  %713 = vmatpush1.bf16.msra.mxu0 %v521
  %714 = vmatprep.mubr.bf16.mxu0 %v205
  %715 = vmatmul.mubr.bf16.gmra.mrb[0].mxu0 %v191
  %v716 = vpop.f32.mrb[0].mxu0
  %v717 = vadd.f32 %v677, %v716
  %v718 = vpop.f32.mrb[0].mxu0
  %v719 = vpop.f32.mrb[0].mxu0
  %v720 = vpop.f32.mrb[0].mxu0
  %721 = vdwg.mxu0
  %722 = vmatprep.subr.bf16.mxu0 0
  %723 = vmatpush1.bf16.msra.mxu0 %v522
  %724 = vmatprep.subr.bf16.mxu0 0
  %725 = vmatpush1.bf16.msra.mxu0 %v523
  %726 = vmatprep.subr.bf16.mxu0 0
  %727 = vmatpush1.bf16.msra.mxu0 %v524
  %728 = vmatprep.subr.bf16.mxu0 0
  %729 = vmatpush1.bf16.msra.mxu0 %v525
  %730 = vmatprep.subr.bf16.mxu0 0
  %731 = vmatpush1.bf16.msra.mxu0 %v526
  %732 = vmatprep.subr.bf16.mxu0 0
  %733 = vmatpush1.bf16.msra.mxu0 %v527
  %734 = vmatprep.subr.bf16.mxu0 0
  %735 = vmatpush1.bf16.msra.mxu0 %v528
  %736 = vmatprep.subr.bf16.mxu0 0
  %737 = vmatpush1.bf16.msra.mxu0 %v529
  %738 = vmatprep.subr.bf16.mxu0 0
  %739 = vmatpush1.bf16.msra.mxu0 %v530
  %740 = vmatprep.subr.bf16.mxu0 0
  %741 = vmatpush1.bf16.msra.mxu0 %v531
  %742 = vmatprep.subr.bf16.mxu0 0
  %743 = vmatpush1.bf16.msra.mxu0 %v532
  %744 = vmatprep.subr.bf16.mxu0 0
  %745 = vmatpush1.bf16.msra.mxu0 %v533
  %746 = vmatprep.subr.bf16.mxu0 0
  %747 = vmatpush1.bf16.msra.mxu0 %v534
  %748 = vmatprep.subr.bf16.mxu0 0
  %749 = vmatpush1.bf16.msra.mxu0 %v535
  %750 = vmatprep.subr.bf16.mxu0 0
  %751 = vmatpush1.bf16.msra.mxu0 %v536
  %752 = vmatprep.subr.bf16.mxu0 0
  %753 = vmatpush1.bf16.msra.mxu0 %v537
  %754 = vmatprep.mubr.bf16.mxu0 %v209
  %755 = vmatmul.mubr.bf16.gmra.mrb[0].mxu0 %v207
  %v756 = vpop.f32.mrb[0].mxu0
  %v757 = vadd.f32 %v717, %v756
  %v758 = vpop.f32.mrb[0].mxu0
  %v759 = vpop.f32.mrb[0].mxu0
  %v760 = vpop.f32.mrb[0].mxu0
  %761 = vdwg.mxu0
  %v762 = vadd.f32 %v30, %v757
  %vm763 = vcmask 25600
  %764 = vst.msk [vmem:[#allocation2] sm:$0x3] %vm763, %v762
  // Predicated region
  $region30: #{_epilogue_forward.3} parent=0 // pred_check
    %p765 = pneg %p24
  $region31: #{_epilogue_forward.3} parent=0 // pred_check_branch
    %767 = sbr.rel (%p765) target = $region33
  $region32: #{_epilogue_forward.3} parent=0 // pred_region
    %v768 = vld [vmem:[#allocation2] sm:$0x3]
    %v769 = vld [vmem:[%s2] sm:$0x1]
    %v771 = vlaneseq
    %v772 = vshrl.u32 %v771, 7
    %v773 = vsub.s32 0, %v772
    %v774 = vrot.slane %v769, %v773
    %v776 = vadd.f32 %v768, %v774
    %vm777 = vcmp.ge.f32.partialorder %v776, 0.0
    %v778 = vmul.f32 %v776, 0.2
    %v779 = vsel %vm777, %v776, %v778
    %v780 = vmul.f32 %v779, 1.4142135
    %v781 = vpack.c.bf16 %v780, %v780
    %v782 = vld [vmem:[%s3] sm:$0x3]
    %v783 = vld [vmem:[%s4] sm:$0x1]
    %v785 = vlaneseq
    %v786 = vshrl.u32 %v785, 7
    %v787 = vsub.s32 0, %v786
    %v788 = vrot.slane %v783, %v787
    %vm790 = vcmask 31744
    %v792 = vsel %vm790, %v781, 0
    %vm794 = vcmask 1041408
    %v796 = vsel %vm794, %v782, 0
    %798 = vmatprep.subr.bf16.mxu0 0
    %799 = vmatpush1.bf16.msra.mxu0 %v796
    %800 = vmatprep.subr.bf16.mxu0 0
    %801 = vmatpush1.bf16.msra.mxu0 0
    %802 = vmatprep.subr.bf16.mxu0 0
    %803 = vmatpush1.bf16.msra.mxu0 0
    %804 = vmatprep.subr.bf16.mxu0 0
    %805 = vmatpush1.bf16.msra.mxu0 0
    %806 = vmatprep.subr.bf16.mxu0 0
    %807 = vmatpush1.bf16.msra.mxu0 0
    %808 = vmatprep.subr.bf16.mxu0 0
    %809 = vmatpush1.bf16.msra.mxu0 0
    %810 = vmatprep.subr.bf16.mxu0 0
    %811 = vmatpush1.bf16.msra.mxu0 0
    %812 = vmatprep.subr.bf16.mxu0 0
    %813 = vmatpush1.bf16.msra.mxu0 0
    %814 = vmatprep.subr.bf16.mxu0 0
    %815 = vmatpush1.bf16.msra.mxu0 0
    %816 = vmatprep.subr.bf16.mxu0 0
    %817 = vmatpush1.bf16.msra.mxu0 0
    %818 = vmatprep.subr.bf16.mxu0 0
    %819 = vmatpush1.bf16.msra.mxu0 0
    %820 = vmatprep.subr.bf16.mxu0 0
    %821 = vmatpush1.bf16.msra.mxu0 0
    %822 = vmatprep.subr.bf16.mxu0 0
    %823 = vmatpush1.bf16.msra.mxu0 0
    %824 = vmatprep.subr.bf16.mxu0 0
    %825 = vmatpush1.bf16.msra.mxu0 0
    %826 = vmatprep.subr.bf16.mxu0 0
    %827 = vmatpush1.bf16.msra.mxu0 0
    %828 = vmatprep.subr.bf16.mxu0 0
    %829 = vmatpush1.bf16.msra.mxu0 0
    %830 = vmatprep.mubr.bf16.mxu0 0
    %831 = vmatmul.mubr.bf16.gmra.mrb[0].mxu0 %v792
    %v832 = vpop.f32.mrb[0].mxu0
    %v833 = vadd.f32 %v788, %v832
    %v834 = vpop.f32.mrb[0].mxu0
    %v835 = vpop.f32.mrb[0].mxu0
    %v836 = vpop.f32.mrb[0].mxu0
    %837 = vdwg.mxu0
    %v838 = vld [vmem:[%s5] sm:$0x3]
    %v839 = vmul.f32 %v833, %v838
    %vm840 = vcmask 58368
    %v841 = vsel %vm840, %v839, 0.0
    %842 = vadd.xlane.f32.xlu0 %v841
    %v843 = vpop.xlane.xlu0 %842
    %v844 = vmul.f32 %v843, 0.35355338
    %vm845 = vcmask 1024
    %846 = vst.msk [vmem:[%s6] sm:$0x3] %vm845, %v844
  $region33: #{_epilogue_forward.3} parent=0 // pred_fallthru
    _
  // Predicated region
  $region34: #{_epilogue_forward.3} parent=0 // pred_check
    _
  $region35: #{_epilogue_forward.3} parent=0 // pred_check_branch
    %848 = sbr.rel (0) target = $region37
  $region36: #{_epilogue_forward.3} parent=0 // pred_region
    _
  $region37: #{_epilogue_forward.3} parent=0 // pred_fallthru
    _
  // Predicated region
  $region38: #{_epilogue_forward.3} parent=0 // pred_check
    _
  $region39: #{_epilogue_forward.3} parent=0 // pred_check_branch
    %850 = sbr.rel (0) target = $region41
  $region40: #{_epilogue_forward.3} parent=0 // pred_region
    _
  $region41: #{_epilogue_forward.3} parent=0 // pred_fallthru
    _

</llo_original>
